<compile_context>
chip_gen: v6e
topology: v6e:2x2x1
jax: 0.10.0
libtpu: 0.0.40
codegen_flags: <defaults>
</compile_context>

<pallas_src>
import jax
import jax.numpy as jnp
from jax.experimental import pallas as pl
from jax.experimental.pallas import tpu as pltpu


def _round_up(x, m):
    return ((x + m - 1) // m) * m


def mlp_kernel(x_ref, w1_ref, b1_ref, w2_ref, b2_ref, o_ref):
    # Cast X to bf16 in-kernel: VPU work hidden under the MXU slot, avoids a separate
    # wrapper-side cast op that would round-trip X through HBM.
    x = x_ref[...].astype(jnp.bfloat16)
    # Linear 1: bf16 MXU matmul with f32 accumulation, then f32 bias + ReLU on the VPU.
    h = jnp.dot(x, w1_ref[...], preferred_element_type=jnp.float32)
    h = jnp.maximum(h + b1_ref[...], 0.0)          # b1 is (1, D1) -> broadcast over rows
    # TODO(synk): nn.Dropout(p=0.1) omitted (eval-mode identity). For training semantics,
    # build a mask with pltpu.prng_seed / pltpu.prng_random_bits and scale by 1/(1-p).
    # Linear 2 (no trailing nonlinearity/dropout because of `sequence[:-2]` in the module).
    # NOTE: h is re-quantized to bf16 for the second MXU matmul (f32 accumulation kept).
    y = jnp.dot(h.astype(w2_ref.dtype), w2_ref[...],
                preferred_element_type=jnp.float32)
    o_ref[...] = (y + b2_ref[...]).astype(o_ref.dtype)


def mlp_layers_forward(x, w1, b1, w2, b2, *, tile_b=None, out_dtype=jnp.bfloat16):
    """MLPLayers.forward.

    Weights are (in, out) = PyTorch Linear.weight transposed, and are expected to ALREADY
    be bf16 (convert once at parameter-load time, not per call).  Biases are f32.
    X may be f32; it is cast to bf16 inside the kernel.
    """
    B, D0 = x.shape
    D1 = w1.shape[1]
    D2 = w2.shape[1]

    b1f = b1.astype(jnp.float32).reshape(1, D1)
    b2f = b2.astype(jnp.float32).reshape(1, D2)

    # Batch tile: prefer 256-row MXU-filling tiles, but keep >= 4 grid steps so both v7x
    # TensorCores get >= 2 steps and the X-in / Y-out DMAs reach pipeline steady state.
    if tile_b is None:
        tile_b = 256 if B >= 4 * 256 else 128
    # bf16 output packs 2 rows per sublane -> keep the tile a multiple of 16 rows.
    tb = min(tile_b, _round_up(B, 16))
    Bp = _round_up(B, tb)
    xp = jnp.pad(x, ((0, Bp - B), (0, 0))) if Bp != B else x

    grid = (Bp // tb,)

    cost = pl.CostEstimate(
        flops=2 * B * D0 * D1 + 2 * B * D1 * D2,
        transcendentals=0,
        bytes_accessed=(B * D0 * x.dtype.itemsize
                        + D0 * D1 * w1.dtype.itemsize + D1 * 4
                        + D1 * D2 * w2.dtype.itemsize + D2 * 4
                        + B * D2 * jnp.dtype(out_dtype).itemsize),
    )

    out = pl.pallas_call(
        mlp_kernel,
        out_shape=jax.ShapeDtypeStruct((Bp, D2), out_dtype),
        grid_spec=pl.GridSpec(
            grid=grid,
            in_specs=[
                # X tile: pipelined (double-buffered) over the batch axis.
                pl.BlockSpec((tb, D0), lambda i: (i, 0)),
                # Grid-invariant operands: single-buffered (fetched once, resident).
                pl.BlockSpec((D0, D1), lambda i: (0, 0), pipeline_mode=pl.Buffered(1)),
                pl.BlockSpec((1, D1), lambda i: (0, 0), pipeline_mode=pl.Buffered(1)),
                pl.BlockSpec((D1, D2), lambda i: (0, 0), pipeline_mode=pl.Buffered(1)),
                pl.BlockSpec((1, D2), lambda i: (0, 0), pipeline_mode=pl.Buffered(1)),
            ],
            out_specs=pl.BlockSpec((tb, D2), lambda i: (i, 0)),
        ),
        # Batch axis is embarrassingly parallel -> shards across v7x's two TensorCores.
        compiler_params=pltpu.CompilerParams(
            dimension_semantics=("parallel",)),
        cost_estimate=cost,
    )(xp, w1, b1f, w2, b2f)

    # Padded rows compute relu(b1) @ W2 + b2 but are sliced off here (never alias the
    # padded buffer downstream).
    return out[:B] if Bp != B else out


if __name__ == "__main__":
    # Module-default widths (units=[512, 512, 512]).  B=512 -> tb=128 -> grid=(4,), i.e.
    # 2 steps per v7x TensorCore, so the pipeline reaches steady state.
    units = [512, 512, 512]
    B = 512

    key = jax.random.PRNGKey(0)
    k_x, k_w1, k_b1, k_w2, k_b2 = jax.random.split(key, 5)

    x = jax.random.normal(k_x, (B, units[0]), dtype=jnp.float32)

    # Deterministic parameter init (uniform, roughly matching PyTorch Linear scale).
    bound1 = 1.0 / (units[0] ** 0.5)
    w1_f32 = jax.random.uniform(k_w1, (units[0], units[1]), jnp.float32, -bound1, bound1)
    b1 = jax.random.uniform(k_b1, (1, units[1]), jnp.float32, -bound1, bound1)
    bound2 = 1.0 / (units[1] ** 0.5)
    w2_f32 = jax.random.uniform(k_w2, (units[1], units[2]), jnp.float32, -bound2, bound2)
    b2 = jax.random.uniform(k_b2, (1, units[2]), jnp.float32, -bound2, bound2)

    # One-time weight conversion to bf16, OUTSIDE the hot path (carried as bf16 params).
    w1 = w1_f32.astype(jnp.bfloat16)
    w2 = w2_f32.astype(jnp.bfloat16)

    out = jax.block_until_ready(mlp_layers_forward(x, w1, b1, w2, b2))

    # Reference: f32 math on the same bf16-quantized operands the kernel consumes
    # (input cast, bf16 weights, hidden re-quantized to bf16 before the second matmul).
    xq = x.astype(jnp.bfloat16).astype(jnp.float32)
    w1q = w1.astype(jnp.float32)
    w2q = w2.astype(jnp.float32)
    h_ref = jnp.maximum(xq @ w1q + b1, 0.0)
    ref = h_ref.astype(jnp.bfloat16).astype(jnp.float32) @ w2q + b2

    out_f32 = out.astype(jnp.float32)
    assert out.shape == (B, units[2])
    assert out.dtype == jnp.bfloat16
    assert jnp.allclose(out_f32, ref, atol=2e-2, rtol=2e-2), \
        float(jnp.max(jnp.abs(out_f32 - ref)))

    print("KERNEL_OK")
</pallas_src>

<mosaic_0001>
module attributes {stable_mosaic.version = 11 : i64} {
  func.func @mlp_kernel(%arg0: i32, %arg1: memref<128x512xf32, #tpu.memory_space<vmem>>, %arg2: memref<512x512xbf16, #tpu.memory_space<vmem>>, %arg3: memref<1x512xf32, #tpu.memory_space<vmem>>, %arg4: memref<512x512xbf16, #tpu.memory_space<vmem>>, %arg5: memref<1x512xf32, #tpu.memory_space<vmem>>, %arg6: memref<128x512xbf16, #tpu.memory_space<vmem>>) attributes {dimension_semantics = [#tpu.dimension_semantics<parallel>], iteration_bounds = array<i64: 4>, scalar_prefetch = 0 : i64, scratch_operands = 0 : i64, tpu.core_type = #tpu.core_type<tc>, window_params = [{transform_indices = @transform_0, window_bounds = array<i64: 128, 512>}, {pipeline_mode = #tpu.pipeline_mode<synchronous>, transform_indices = @transform_1, window_bounds = array<i64: 512, 512>}, {pipeline_mode = #tpu.pipeline_mode<synchronous>, transform_indices = @transform_2, window_bounds = array<i64: 1, 512>}, {pipeline_mode = #tpu.pipeline_mode<synchronous>, transform_indices = @transform_3, window_bounds = array<i64: 512, 512>}, {pipeline_mode = #tpu.pipeline_mode<synchronous>, transform_indices = @transform_4, window_bounds = array<i64: 1, 512>}, {transform_indices = @transform_5, window_bounds = array<i64: 128, 512>}]} {
    %c0 = arith.constant 0 : index
    %c0_0 = arith.constant 0 : index
    %0 = vector.load %arg1[%c0, %c0_0] : memref<128x512xf32, #tpu.memory_space<vmem>>, vector<128x512xf32>
    %1 = arith.truncf %0 : vector<128x512xf32> to vector<128x512xbf16>
    %c0_1 = arith.constant 0 : index
    %c0_2 = arith.constant 0 : index
    %2 = vector.load %arg2[%c0_1, %c0_2] : memref<512x512xbf16, #tpu.memory_space<vmem>>, vector<512x512xbf16>
    %cst = arith.constant dense<0.000000e+00> : vector<128x512xf32>
    %3 = tpu.matmul %1, %2, %cst {dimension_numbers = #tpu.dot_dimension_numbers<[1], [0], [0], [1], [0, 0, 1, 1], [], []>} : vector<128x512xbf16>, vector<512x512xbf16>, vector<128x512xf32> -> vector<128x512xf32>
    %c0_3 = arith.constant 0 : index
    %c0_4 = arith.constant 0 : index
    %4 = vector.load %arg3[%c0_3, %c0_4] : memref<1x512xf32, #tpu.memory_space<vmem>>, vector<1x512xf32>
    %5 = vector.broadcast %4 : vector<1x512xf32> to vector<128x512xf32>
    %6 = arith.addf %3, %5 : vector<128x512xf32>
    %cst_5 = arith.constant 0.000000e+00 : f32
    %7 = vector.broadcast %cst_5 : f32 to vector<128x512xf32>
    %8 = arith.maximumf %6, %7 : vector<128x512xf32>
    %9 = arith.truncf %8 : vector<128x512xf32> to vector<128x512xbf16>
    %c0_6 = arith.constant 0 : index
    %c0_7 = arith.constant 0 : index
    %10 = vector.load %arg4[%c0_6, %c0_7] : memref<512x512xbf16, #tpu.memory_space<vmem>>, vector<512x512xbf16>
    %cst_8 = arith.constant dense<0.000000e+00> : vector<128x512xf32>
    %11 = tpu.matmul %9, %10, %cst_8 {dimension_numbers = #tpu.dot_dimension_numbers<[1], [0], [0], [1], [0, 0, 1, 1], [], []>} : vector<128x512xbf16>, vector<512x512xbf16>, vector<128x512xf32> -> vector<128x512xf32>
    %c0_9 = arith.constant 0 : index
    %c0_10 = arith.constant 0 : index
    %12 = vector.load %arg5[%c0_9, %c0_10] : memref<1x512xf32, #tpu.memory_space<vmem>>, vector<1x512xf32>
    %13 = vector.broadcast %12 : vector<1x512xf32> to vector<128x512xf32>
    %14 = arith.addf %11, %13 : vector<128x512xf32>
    %15 = arith.truncf %14 : vector<128x512xf32> to vector<128x512xbf16>
    %c0_11 = arith.constant 0 : index
    %c0_12 = arith.constant 0 : index
    %16 = vector.load %arg6[%c0_11, %c0_12] : memref<128x512xbf16, #tpu.memory_space<vmem>>, vector<128x512xbf16>
    tpu.vector_store %arg6[%c0_11, %c0_12], %15 {strides = array<i32>} : memref<128x512xbf16, #tpu.memory_space<vmem>>, vector<128x512xbf16>,
    return
  }
  func.func @transform_0(%arg0: i32) -> (i32, i32) {
    %c0_i32 = arith.constant 0 : i32
    %c0_i32_0 = arith.constant 0 : i32
    return %arg0, %c0_i32 : i32, i32
  }
  func.func @transform_1(%arg0: i32) -> (i32, i32) {
    %c0_i32 = arith.constant 0 : i32
    %c0_i32_0 = arith.constant 0 : i32
    %c0_i32_1 = arith.constant 0 : i32
    return %c0_i32, %c0_i32_0 : i32, i32
  }
  func.func @transform_2(%arg0: i32) -> (i32, i32) {
    %c0_i32 = arith.constant 0 : i32
    %c0_i32_0 = arith.constant 0 : i32
    %c0_i32_1 = arith.constant 0 : i32
    return %c0_i32, %c0_i32_0 : i32, i32
  }
  func.func @transform_3(%arg0: i32) -> (i32, i32) {
    %c0_i32 = arith.constant 0 : i32
    %c0_i32_0 = arith.constant 0 : i32
    %c0_i32_1 = arith.constant 0 : i32
    return %c0_i32, %c0_i32_0 : i32, i32
  }
  func.func @transform_4(%arg0: i32) -> (i32, i32) {
    %c0_i32 = arith.constant 0 : i32
    %c0_i32_0 = arith.constant 0 : i32
    %c0_i32_1 = arith.constant 0 : i32
    return %c0_i32, %c0_i32_0 : i32, i32
  }
  func.func @transform_5(%arg0: i32) -> (i32, i32) {
    %c0_i32 = arith.constant 0 : i32
    %c0_i32_0 = arith.constant 0 : i32
    return %arg0, %c0_i32 : i32, i32
  }
}

</mosaic_0001>

<llo_original>
// kernel: tpu_custom_call.1
$region0: #{tpu_custom_call.1}
  #allocation0 [shape = 'u32[]', space=smem, size = 0x4, offset = 0x4, fixed_abs, tag = 'smem constant byte address 0x4 - core index']
  #allocation1 [shape = 'u32[144,128]{1,0:T(1,128)}', space=vmem, size = 0x12000, scoped, tag = 'internal scratch']
  %s0 = inlined_call_operand.hbm [shape: f32[512,512], index: 0, kind: input, shape index: {}]
  %s1 = inlined_call_operand.hbm [shape: bf16[512,512], index: 1, kind: input, shape index: {}]
  %s2 = inlined_call_operand.hbm [shape: f32[1,512], index: 2, kind: input, shape index: {}]
  %s3 = inlined_call_operand.hbm [shape: bf16[512,512], index: 3, kind: input, shape index: {}]
  %s4 = inlined_call_operand.vmem [shape: f32[1,512], index: 4, kind: input, shape index: {}]
  %s5 = inlined_call_operand.hbm [shape: bf16[512,512], index: 5, kind: output, shape index: {}]
  %s6 = sld [smem:[#allocation0]]
  $region69: #{tpu_custom_call.1} parent=0
    _
  %s8 = ssub.s32 1, %s6
  %s9 = scalar_select 0, %s8, %s6
  $region1: #{tpu_custom_call.1} parent=0
    #allocation2 [shape = 'u8[524288]{0}', space=vmem, size = 0x80000, scoped, tag = 'input window, operand 0']
    #allocation3 [shape = 's32[2]{0}', space=sflag, size = 0x8, scoped, tag = 'scoped memory for tpu_custom_call.1']
    #allocation4 [shape = 's32[2]{0}', space=sflag, size = 0x8, scoped, tag = 'scoped memory for tpu_custom_call.1']
    #allocation5 [shape = 'u8[524288]{0}', space=vmem, size = 0x80000, scoped, tag = 'input window, operand 1, single buffered']
    #allocation6 [shape = 's32[1]{0}', space=sflag, size = 0x4, scoped, tag = 'scoped memory for tpu_custom_call.1']
    #allocation7 [shape = 'u8[2048]{0}', space=vmem, size = 0x800, scoped, tag = 'input window, operand 2, single buffered']
    #allocation8 [shape = 'u8[524288]{0}', space=vmem, size = 0x80000, scoped, tag = 'input window, operand 3, single buffered']
    #allocation9 [shape = 's32[1]{0}', space=sflag, size = 0x4, scoped, tag = 'scoped memory for tpu_custom_call.1']
    #allocation10 [shape = 'u8[262144]{0}', space=vmem, size = 0x40000, scoped, tag = 'output window, operand 0']
    %10 = vsyncpa [#allocation3], 0
    %s11 = scalar_lea.sflag [#allocation3], 1
    %12 = vsyncpa %s11, 0
    %13 = vsyncpa [#allocation6], 0
    %14 = vsyncpa [#allocation9], 0
    %15 = vsyncpa [#allocation4], 0
    %s16 = scalar_lea.sflag [#allocation4], 1
    %17 = vsyncpa %s16, 0
    loop: start=0, step=1, limit=6
    $region2: #{tpu_custom_call.1} parent=1 // loop_pre_header
      _
    $region3: #{tpu_custom_call.1} parent=1 // loop_header
      %s19 = sphi 0, %s23
      %p20 = scmp.ge.s32.totalorder %s19, 6
      %s29 = sphi 0, %s31
      %s32 = sphi 0, %s29
      %s33 = sphi 0, %s32
      %s49 = sphi 0, %s33
      %s53 = sphi 0, %s53
      %s55 = sphi 0, %s53
      %s56 = sphi 0, %s55
      %s70 = sphi 0, %s56
      %s74 = sphi 0, %s74
      %s76 = sphi 0, %s74
      %s77 = sphi 0, %s76
      %s91 = sphi 0, %s77
      %s95 = sphi 0, %s95
      %s97 = sphi 0, %s95
      %s98 = sphi 0, %s97
      %s112 = sphi 0, %s98
      %s116 = sphi 0, %s116
      %s118 = sphi 0, %s116
      %s119 = sphi 0, %s118
      %s133 = sphi 0, %s119
      %s139 = sphi 0, %s141
      %s142 = sphi 0, %s139
      %s143 = sphi 0, %s142
      %s159 = sphi 0, %s143
    $region4: #{tpu_custom_call.1} parent=1 // loop_header_branch
      %22 = sbr.rel (%p20) target = $region8
    $region5: #{tpu_custom_call.1} parent=1 // loop_body
      %s24 = ssub.s32 %s19, 1
      %s25 = ssub.s32 %s19, 2
      %s26 = sadd.s32 %s19, 1
      %s27 = ssub.s32 %s19, %s26
      %p28 = scmp.eq.s32.totalorder %s27, 0
      %s30 = sadd.s32 %s29, 1
      %s31 = scalar_select %p28, %s29, %s30
      %p34 = pneg %p28
      %p35 = scmp.eq.s32.totalorder %s19, 3
      %p36 = por %p34, %p35
      %p37 = scmp.ne.s32.totalorder %s29, %s32
      %p38 = scmp.eq.s32.totalorder %s19, 0
      %p39 = por %p37, %p38
      %p40 = scmp.ne.s32.totalorder %s29, %s32
      %p41 = scmp.eq.s32.totalorder %s24, 3
      %p42 = por %p40, %p41
      %p43 = scmp.ne.s32.totalorder %s32, %s33
      %p44 = scmp.eq.s32.totalorder %s24, 0
      %p45 = por %p43, %p44
      %p46 = scmp.ne.s32.totalorder %s32, %s33
      %p47 = scmp.eq.s32.totalorder %s25, 3
      %p48 = por %p46, %p47
      %p50 = scmp.ne.s32.totalorder %s33, %s49
      %p51 = scmp.eq.s32.totalorder %s25, 0
      %p52 = por %p50, %p51
      %s54 = sadd.s32 %s53, 1
      %p57 = scmp.eq.s32.totalorder %s19, 3
      %p58 = scmp.ne.s32.totalorder %s53, %s55
      %p59 = scmp.eq.s32.totalorder %s19, 0
      %p60 = por %p58, %p59
      %p61 = scmp.ne.s32.totalorder %s53, %s55
      %p62 = scmp.eq.s32.totalorder %s24, 3
      %p63 = por %p61, %p62
      %p64 = scmp.ne.s32.totalorder %s55, %s56
      %p65 = scmp.eq.s32.totalorder %s24, 0
      %p66 = por %p64, %p65
      %p67 = scmp.ne.s32.totalorder %s55, %s56
      %p68 = scmp.eq.s32.totalorder %s25, 3
      %p69 = por %p67, %p68
      %p71 = scmp.ne.s32.totalorder %s56, %s70
      %p72 = scmp.eq.s32.totalorder %s25, 0
      %p73 = por %p71, %p72
      %s75 = sadd.s32 %s74, 1
      %p78 = scmp.eq.s32.totalorder %s19, 3
      %p79 = scmp.ne.s32.totalorder %s74, %s76
      %p80 = scmp.eq.s32.totalorder %s19, 0
      %p81 = por %p79, %p80
      %p82 = scmp.ne.s32.totalorder %s74, %s76
      %p83 = scmp.eq.s32.totalorder %s24, 3
      %p84 = por %p82, %p83
      %p85 = scmp.ne.s32.totalorder %s76, %s77
      %p86 = scmp.eq.s32.totalorder %s24, 0
      %p87 = por %p85, %p86
      %p88 = scmp.ne.s32.totalorder %s76, %s77
      %p89 = scmp.eq.s32.totalorder %s25, 3
      %p90 = por %p88, %p89
      %p92 = scmp.ne.s32.totalorder %s77, %s91
      %p93 = scmp.eq.s32.totalorder %s25, 0
      %p94 = por %p92, %p93
      %s96 = sadd.s32 %s95, 1
      %p99 = scmp.eq.s32.totalorder %s19, 3
      %p100 = scmp.ne.s32.totalorder %s95, %s97
      %p101 = scmp.eq.s32.totalorder %s19, 0
      %p102 = por %p100, %p101
      %p103 = scmp.ne.s32.totalorder %s95, %s97
      %p104 = scmp.eq.s32.totalorder %s24, 3
      %p105 = por %p103, %p104
      %p106 = scmp.ne.s32.totalorder %s97, %s98
      %p107 = scmp.eq.s32.totalorder %s24, 0
      %p108 = por %p106, %p107
      %p109 = scmp.ne.s32.totalorder %s97, %s98
      %p110 = scmp.eq.s32.totalorder %s25, 3
      %p111 = por %p109, %p110
      %p113 = scmp.ne.s32.totalorder %s98, %s112
      %p114 = scmp.eq.s32.totalorder %s25, 0
      %p115 = por %p113, %p114
      %s117 = sadd.s32 %s116, 1
      %p120 = scmp.eq.s32.totalorder %s19, 3
      %p121 = scmp.ne.s32.totalorder %s116, %s118
      %p122 = scmp.eq.s32.totalorder %s19, 0
      %p123 = por %p121, %p122
      %p124 = scmp.ne.s32.totalorder %s116, %s118
      %p125 = scmp.eq.s32.totalorder %s24, 3
      %p126 = por %p124, %p125
      %p127 = scmp.ne.s32.totalorder %s118, %s119
      %p128 = scmp.eq.s32.totalorder %s24, 0
      %p129 = por %p127, %p128
      %p130 = scmp.ne.s32.totalorder %s118, %s119
      %p131 = scmp.eq.s32.totalorder %s25, 3
      %p132 = por %p130, %p131
      %p134 = scmp.ne.s32.totalorder %s119, %s133
      %p135 = scmp.eq.s32.totalorder %s25, 0
      %p136 = por %p134, %p135
      %s137 = ssub.s32 %s19, %s26
      %p138 = scmp.eq.s32.totalorder %s137, 0
      %s140 = sadd.s32 %s139, 1
      %s141 = scalar_select %p138, %s139, %s140
      %p144 = pneg %p138
      %p145 = scmp.eq.s32.totalorder %s19, 3
      %p146 = por %p144, %p145
      %p147 = scmp.ne.s32.totalorder %s139, %s142
      %p148 = scmp.eq.s32.totalorder %s19, 0
      %p149 = por %p147, %p148
      %p150 = scmp.ne.s32.totalorder %s139, %s142
      %p151 = scmp.eq.s32.totalorder %s24, 3
      %p152 = por %p150, %p151
      %p153 = scmp.ne.s32.totalorder %s142, %s143
      %p154 = scmp.eq.s32.totalorder %s24, 0
      %p155 = por %p153, %p154
      %p156 = scmp.ne.s32.totalorder %s142, %s143
      %p157 = scmp.eq.s32.totalorder %s25, 3
      %p158 = por %p156, %p157
      %p160 = scmp.ne.s32.totalorder %s143, %s159
      %p161 = scmp.eq.s32.totalorder %s25, 0
      %p162 = por %p160, %p161
      %p163 = scmp.le.s32.totalorder 1, %s19
      %p164 = scmp.lt.s32.totalorder %s19, 5
      %p165 = pnand %p163, %p164
      %p166 = pneg %p165
      // Predicated region
      $region9: #{tpu_custom_call.1} parent=5 // pred_check
        _
      $region10: #{tpu_custom_call.1} parent=5 // pred_check_branch
        %168 = sbr.rel (%p165) target = $region12
      $region11: #{tpu_custom_call.1} parent=5 // pred_region
        %s169 = ssub.s32 %s19, 1
        // Predicated region
        $region13: #{tpu_custom_call.1} parent=11 // pred_check
          %p170 = pneg %p66
        $region14: #{tpu_custom_call.1} parent=11 // pred_check_branch
          %172 = sbr.rel (%p170) target = $region16
        $region15: #{tpu_custom_call.1} parent=11 // pred_region
          %s174 = ssub.s32 16384, 16384
          %175 = vsyncadd [#allocation6], %s174
          %s176 = sshll.u32 [#allocation5], 4
          %s177 = int_to_ptr.vmem [resolvable:$true] %s176
          %182 = dma.hbm_to_vmem [thread:$0]  %s1, 16384, %s177, [#allocation6], 256, 256, 16
        $region16: #{tpu_custom_call.1} parent=11 // pred_fallthru
          _
        // Predicated region
        $region17: #{tpu_custom_call.1} parent=11 // pred_check
          %p183 = pneg %p87
        $region18: #{tpu_custom_call.1} parent=11 // pred_check_branch
          %185 = sbr.rel (%p183) target = $region20
        $region19: #{tpu_custom_call.1} parent=11 // pred_region
          %s187 = ssub.s32 64, 64
          %188 = vsyncadd [#allocation6], %s187
          %s190 = sshll.u32 [#allocation7], 4
          %s191 = int_to_ptr.vmem [resolvable:$true] %s190
          %193 = dma.hbm_to_vmem [thread:$0]  %s2, 64, %s191, [#allocation6]
        $region20: #{tpu_custom_call.1} parent=11 // pred_fallthru
          _
        // Predicated region
        $region21: #{tpu_custom_call.1} parent=11 // pred_check
          %p194 = pneg %p108
        $region22: #{tpu_custom_call.1} parent=11 // pred_check_branch
          %196 = sbr.rel (%p194) target = $region24
        $region23: #{tpu_custom_call.1} parent=11 // pred_region
          %s198 = ssub.s32 16384, 16384
          %199 = vsyncadd [#allocation9], %s198
          %s200 = sshll.u32 [#allocation8], 4
          %s201 = int_to_ptr.vmem [resolvable:$true] %s200
          %206 = dma.hbm_to_vmem [thread:$0]  %s3, 16384, %s201, [#allocation9], 256, 256, 16
        $region24: #{tpu_custom_call.1} parent=11 // pred_fallthru
          _
        // Predicated region
        $region25: #{tpu_custom_call.1} parent=11 // pred_check
          %p207 = pneg %p129
        $region26: #{tpu_custom_call.1} parent=11 // pred_check_branch
          %209 = sbr.rel (%p207) target = $region28
        $region27: #{tpu_custom_call.1} parent=11 // pred_region
          _
        $region28: #{tpu_custom_call.1} parent=11 // pred_fallthru
          _
      $region12: #{tpu_custom_call.1} parent=5 // pred_fallthru
        _
      %p210 = scmp.lt.s32.totalorder %s19, 4
      // Predicated region
      $region29: #{tpu_custom_call.1} parent=5 // pred_check
        %p211 = pneg %p210
      $region30: #{tpu_custom_call.1} parent=5 // pred_check_branch
        %213 = sbr.rel (%p211) target = $region32
      $region31: #{tpu_custom_call.1} parent=5 // pred_region
        // Predicated region
        $region33: #{tpu_custom_call.1} parent=31 // pred_check
          %p214 = pneg %p39
        $region34: #{tpu_custom_call.1} parent=31 // pred_check_branch
          %216 = sbr.rel (%p214) target = $region36
        $region35: #{tpu_custom_call.1} parent=31 // pred_region
          %s217 = sand.u32 %s29, 1
          %s218 = scalar_lea.sflag [#allocation3], %s217
          %s219 = sand.u32 %s29, 1
          %s220 = smul.addr %s219, 512
          %s221 = scalar_lea.vmem [#allocation2], %s220
          %s222 = smul.u32 16, %s19
          %s224 = ssub.s32 8192, 8192
          %225 = vsyncadd %s218, %s224
          %s226 = smul.addr %s222, 4
          %s227 = smul.addr %s226, 128
          %s228 = scalar_lea.hbm %s0, %s227
          %s229 = sshll.u32 %s221, 4
          %s230 = int_to_ptr.vmem [resolvable:$true] %s229
          %235 = dma.hbm_to_vmem [thread:$0]  %s228, 8192, %s230, %s218, 512, 512, 32
        $region36: #{tpu_custom_call.1} parent=31 // pred_fallthru
          _
      $region32: #{tpu_custom_call.1} parent=5 // pred_fallthru
        _
      %p236 = scmp.le.s32.totalorder 1, %s19
      %p237 = scmp.lt.s32.totalorder %s19, 5
      %p238 = pnand %p236, %p237
      %p239 = pneg %p238
      // Predicated region
      $region37: #{tpu_custom_call.1} parent=5 // pred_check
        _
      $region38: #{tpu_custom_call.1} parent=5 // pred_check_branch
        %241 = sbr.rel (%p238) target = $region40
      $region39: #{tpu_custom_call.1} parent=5 // pred_region
        %s242 = ssub.s32 %s19, 1
        %s243 = sand.u32 %s32, 1
        %s244 = scalar_lea.sflag [#allocation3], %s243
        %s245 = sand.u32 %s32, 1
        %s246 = smul.addr %s245, 512
        %s247 = scalar_lea.vmem [#allocation2], %s246
        // Predicated region
        $region41: #{tpu_custom_call.1} parent=39 // pred_check
          %p248 = pneg %p45
        $region42: #{tpu_custom_call.1} parent=39 // pred_check_branch
          %250 = sbr.rel (%p248) target = $region44
        $region43: #{tpu_custom_call.1} parent=39 // pred_region
          %251 = dma.done %s244, 8192
        $region44: #{tpu_custom_call.1} parent=39 // pred_fallthru
          _
        // Predicated region
        $region45: #{tpu_custom_call.1} parent=39 // pred_check
          %p252 = pneg %p66
        $region46: #{tpu_custom_call.1} parent=39 // pred_check_branch
          %254 = sbr.rel (%p252) target = $region48
        $region47: #{tpu_custom_call.1} parent=39 // pred_region
          %255 = dma.done [#allocation6], 16384
        $region48: #{tpu_custom_call.1} parent=39 // pred_fallthru
          _
        // Predicated region
        $region49: #{tpu_custom_call.1} parent=39 // pred_check
          %p256 = pneg %p87
        $region50: #{tpu_custom_call.1} parent=39 // pred_check_branch
          %258 = sbr.rel (%p256) target = $region52
        $region51: #{tpu_custom_call.1} parent=39 // pred_region
          %259 = dma.done [#allocation6], 64
        $region52: #{tpu_custom_call.1} parent=39 // pred_fallthru
          _
        // Predicated region
        $region53: #{tpu_custom_call.1} parent=39 // pred_check
          %p260 = pneg %p108
        $region54: #{tpu_custom_call.1} parent=39 // pred_check_branch
          %262 = sbr.rel (%p260) target = $region56
        $region55: #{tpu_custom_call.1} parent=39 // pred_region
          %263 = dma.done [#allocation9], 16384
        $region56: #{tpu_custom_call.1} parent=39 // pred_fallthru
          _
        %s264 = sand.u32 %s32, 1
        %s265 = scalar_lea.sflag [#allocation3], %s264
        %s266 = sand.u32 %s32, 1
        %s267 = smul.addr %s266, 512
        %s268 = scalar_lea.vmem [#allocation2], %s267
        %p269 = pneg %p45
        %p270 = pneg %p42
        %p271 = pneg %p66
        %p272 = pneg %p63
        %p273 = pneg %p87
        %p274 = pneg %p84
        %p275 = pneg %p108
        %p276 = pneg %p105
        %p277 = pneg %p129
        %p278 = pneg %p126
        %p279 = pneg %p155
        %p280 = pneg %p152
        %s281 = sand.u32 %s142, 1
        %s282 = scalar_lea.sflag [#allocation4], %s281
        %s283 = sand.u32 %s142, 1
        %s284 = smul.addr %s283, 256
        %s285 = scalar_lea.vmem [#allocation10], %s284
        %s286 = smul.u32 16, %s24
        %s287 = smul.u32 16, %s24
        %v288 = vld [vmem:[%s247] sm:$0xff]
        %v289 = vld [vmem:[%s247 + $0x8] sm:$0xff]
        %v290 = vld [vmem:[%s247 + $0x10] sm:$0xff]
        %v291 = vld [vmem:[%s247 + $0x18] sm:$0xff]
        %v292 = vld [vmem:[%s247 + $0x20] sm:$0xff]
        %v293 = vld [vmem:[%s247 + $0x28] sm:$0xff]
        %v294 = vld [vmem:[%s247 + $0x30] sm:$0xff]
        %v295 = vld [vmem:[%s247 + $0x38] sm:$0xff]
        %v296 = vld [vmem:[%s247 + $0x40] sm:$0xff]
        %v297 = vld [vmem:[%s247 + $0x48] sm:$0xff]
        %v298 = vld [vmem:[%s247 + $0x50] sm:$0xff]
        %v299 = vld [vmem:[%s247 + $0x58] sm:$0xff]
        %v300 = vld [vmem:[%s247 + $0x60] sm:$0xff]
        %v301 = vld [vmem:[%s247 + $0x68] sm:$0xff]
        %v302 = vld [vmem:[%s247 + $0x70] sm:$0xff]
        %v303 = vld [vmem:[%s247 + $0x78] sm:$0xff]
        %v304 = vld [vmem:[%s247 + $0x80] sm:$0xff]
        %v305 = vld [vmem:[%s247 + $0x88] sm:$0xff]
        %v306 = vld [vmem:[%s247 + $0x90] sm:$0xff]
        %v307 = vld [vmem:[%s247 + $0x98] sm:$0xff]
        %v308 = vld [vmem:[%s247 + $0xa0] sm:$0xff]
        %v309 = vld [vmem:[%s247 + $0xa8] sm:$0xff]
        %v310 = vld [vmem:[%s247 + $0xb0] sm:$0xff]
        %v311 = vld [vmem:[%s247 + $0xb8] sm:$0xff]
        %v312 = vld [vmem:[%s247 + $0xc0] sm:$0xff]
        %v313 = vld [vmem:[%s247 + $0xc8] sm:$0xff]
        %v314 = vld [vmem:[%s247 + $0xd0] sm:$0xff]
        %v315 = vld [vmem:[%s247 + $0xd8] sm:$0xff]
        %v316 = vld [vmem:[%s247 + $0xe0] sm:$0xff]
        %v317 = vld [vmem:[%s247 + $0xe8] sm:$0xff]
        %v318 = vld [vmem:[%s247 + $0xf0] sm:$0xff]
        %v319 = vld [vmem:[%s247 + $0xf8] sm:$0xff]
        %v320 = vld [vmem:[%s247 + $0x100] sm:$0xff]
        %v321 = vld [vmem:[%s247 + $0x108] sm:$0xff]
        %v322 = vld [vmem:[%s247 + $0x110] sm:$0xff]
        %v323 = vld [vmem:[%s247 + $0x118] sm:$0xff]
        %v324 = vld [vmem:[%s247 + $0x120] sm:$0xff]
        %v325 = vld [vmem:[%s247 + $0x128] sm:$0xff]
        %v326 = vld [vmem:[%s247 + $0x130] sm:$0xff]
        %v327 = vld [vmem:[%s247 + $0x138] sm:$0xff]
        %v328 = vld [vmem:[%s247 + $0x140] sm:$0xff]
        %v329 = vld [vmem:[%s247 + $0x148] sm:$0xff]
        %v330 = vld [vmem:[%s247 + $0x150] sm:$0xff]
        %v331 = vld [vmem:[%s247 + $0x158] sm:$0xff]
        %v332 = vld [vmem:[%s247 + $0x160] sm:$0xff]
        %v333 = vld [vmem:[%s247 + $0x168] sm:$0xff]
        %v334 = vld [vmem:[%s247 + $0x170] sm:$0xff]
        %v335 = vld [vmem:[%s247 + $0x178] sm:$0xff]
        %v336 = vld [vmem:[%s247 + $0x180] sm:$0xff]
        %v337 = vld [vmem:[%s247 + $0x188] sm:$0xff]
        %v338 = vld [vmem:[%s247 + $0x190] sm:$0xff]
        %v339 = vld [vmem:[%s247 + $0x198] sm:$0xff]
        %v340 = vld [vmem:[%s247 + $0x1a0] sm:$0xff]
        %v341 = vld [vmem:[%s247 + $0x1a8] sm:$0xff]
        %v342 = vld [vmem:[%s247 + $0x1b0] sm:$0xff]
        %v343 = vld [vmem:[%s247 + $0x1b8] sm:$0xff]
        %v344 = vld [vmem:[%s247 + $0x1c0] sm:$0xff]
        %v345 = vld [vmem:[%s247 + $0x1c8] sm:$0xff]
        %v346 = vld [vmem:[%s247 + $0x1d0] sm:$0xff]
        %v347 = vld [vmem:[%s247 + $0x1d8] sm:$0xff]
        %v348 = vld [vmem:[%s247 + $0x1e0] sm:$0xff]
        %v349 = vld [vmem:[%s247 + $0x1e8] sm:$0xff]
        %v350 = vld [vmem:[%s247 + $0x1f0] sm:$0xff]
        %v351 = vld [vmem:[%s247 + $0x1f8] sm:$0xff]
        %v352 = vpack.c.bf16 %v292, %v288
        %v353 = vpack.c.bf16 %v293, %v289
        %v354 = vpack.c.bf16 %v294, %v290
        %v355 = vpack.c.bf16 %v295, %v291
        %v356 = vpack.c.bf16 %v300, %v296
        %v357 = vpack.c.bf16 %v301, %v297
        %v358 = vpack.c.bf16 %v302, %v298
        %v359 = vpack.c.bf16 %v303, %v299
        %v360 = vpack.c.bf16 %v308, %v304
        %v361 = vpack.c.bf16 %v309, %v305
        %v362 = vpack.c.bf16 %v310, %v306
        %v363 = vpack.c.bf16 %v311, %v307
        %v364 = vpack.c.bf16 %v316, %v312
        %v365 = vpack.c.bf16 %v317, %v313
        %v366 = vpack.c.bf16 %v318, %v314
        %v367 = vpack.c.bf16 %v319, %v315
        %v368 = vpack.c.bf16 %v324, %v320
        %v369 = vpack.c.bf16 %v325, %v321
        %v370 = vpack.c.bf16 %v326, %v322
        %v371 = vpack.c.bf16 %v327, %v323
        %v372 = vpack.c.bf16 %v332, %v328
        %v373 = vpack.c.bf16 %v333, %v329
        %v374 = vpack.c.bf16 %v334, %v330
        %v375 = vpack.c.bf16 %v335, %v331
        %v376 = vpack.c.bf16 %v340, %v336
        %v377 = vpack.c.bf16 %v341, %v337
        %v378 = vpack.c.bf16 %v342, %v338
        %v379 = vpack.c.bf16 %v343, %v339
        %v380 = vpack.c.bf16 %v348, %v344
        %v381 = vpack.c.bf16 %v349, %v345
        %v382 = vpack.c.bf16 %v350, %v346
        %v383 = vpack.c.bf16 %v351, %v347
        %v384 = vld [vmem:[#allocation5] sm:$0xff]
        %v385 = vld [vmem:[#allocation5 + $0x8] sm:$0xff]
        %v386 = vld [vmem:[#allocation5 + $0x10] sm:$0xff]
        %v387 = vld [vmem:[#allocation5 + $0x18] sm:$0xff]
        %v388 = vld [vmem:[#allocation5 + $0x20] sm:$0xff]
        %v389 = vld [vmem:[#allocation5 + $0x28] sm:$0xff]
        %v390 = vld [vmem:[#allocation5 + $0x30] sm:$0xff]
        %v391 = vld [vmem:[#allocation5 + $0x38] sm:$0xff]
        %v392 = vld [vmem:[#allocation5 + $0x40] sm:$0xff]
        %v393 = vld [vmem:[#allocation5 + $0x48] sm:$0xff]
        %v394 = vld [vmem:[#allocation5 + $0x50] sm:$0xff]
        %v395 = vld [vmem:[#allocation5 + $0x58] sm:$0xff]
        %v396 = vld [vmem:[#allocation5 + $0x60] sm:$0xff]
        %v397 = vld [vmem:[#allocation5 + $0x68] sm:$0xff]
        %v398 = vld [vmem:[#allocation5 + $0x70] sm:$0xff]
        %v399 = vld [vmem:[#allocation5 + $0x78] sm:$0xff]
        %v400 = vld [vmem:[#allocation5 + $0x80] sm:$0xff]
        %v401 = vld [vmem:[#allocation5 + $0x88] sm:$0xff]
        %v402 = vld [vmem:[#allocation5 + $0x90] sm:$0xff]
        %v403 = vld [vmem:[#allocation5 + $0x98] sm:$0xff]
        %v404 = vld [vmem:[#allocation5 + $0xa0] sm:$0xff]
        %v405 = vld [vmem:[#allocation5 + $0xa8] sm:$0xff]
        %v406 = vld [vmem:[#allocation5 + $0xb0] sm:$0xff]
        %v407 = vld [vmem:[#allocation5 + $0xb8] sm:$0xff]
        %v408 = vld [vmem:[#allocation5 + $0xc0] sm:$0xff]
        %v409 = vld [vmem:[#allocation5 + $0xc8] sm:$0xff]
        %v410 = vld [vmem:[#allocation5 + $0xd0] sm:$0xff]
        %v411 = vld [vmem:[#allocation5 + $0xd8] sm:$0xff]
        %v412 = vld [vmem:[#allocation5 + $0xe0] sm:$0xff]
        %v413 = vld [vmem:[#allocation5 + $0xe8] sm:$0xff]
        %v414 = vld [vmem:[#allocation5 + $0xf0] sm:$0xff]
        %v415 = vld [vmem:[#allocation5 + $0xf8] sm:$0xff]
        %v416 = vld [vmem:[#allocation5 + $0x100] sm:$0xff]
        %v417 = vld [vmem:[#allocation5 + $0x108] sm:$0xff]
        %v418 = vld [vmem:[#allocation5 + $0x110] sm:$0xff]
        %v419 = vld [vmem:[#allocation5 + $0x118] sm:$0xff]
        %v420 = vld [vmem:[#allocation5 + $0x120] sm:$0xff]
        %v421 = vld [vmem:[#allocation5 + $0x128] sm:$0xff]
        %v422 = vld [vmem:[#allocation5 + $0x130] sm:$0xff]
        %v423 = vld [vmem:[#allocation5 + $0x138] sm:$0xff]
        %v424 = vld [vmem:[#allocation5 + $0x140] sm:$0xff]
        %v425 = vld [vmem:[#allocation5 + $0x148] sm:$0xff]
        %v426 = vld [vmem:[#allocation5 + $0x150] sm:$0xff]
        %v427 = vld [vmem:[#allocation5 + $0x158] sm:$0xff]
        %v428 = vld [vmem:[#allocation5 + $0x160] sm:$0xff]
        %v429 = vld [vmem:[#allocation5 + $0x168] sm:$0xff]
        %v430 = vld [vmem:[#allocation5 + $0x170] sm:$0xff]
        %v431 = vld [vmem:[#allocation5 + $0x178] sm:$0xff]
        %v432 = vld [vmem:[#allocation5 + $0x180] sm:$0xff]
        %v433 = vld [vmem:[#allocation5 + $0x188] sm:$0xff]
        %v434 = vld [vmem:[#allocation5 + $0x190] sm:$0xff]
        %v435 = vld [vmem:[#allocation5 + $0x198] sm:$0xff]
        %v436 = vld [vmem:[#allocation5 + $0x1a0] sm:$0xff]
        %v437 = vld [vmem:[#allocation5 + $0x1a8] sm:$0xff]
        %v438 = vld [vmem:[#allocation5 + $0x1b0] sm:$0xff]
        %v439 = vld [vmem:[#allocation5 + $0x1b8] sm:$0xff]
        %v440 = vld [vmem:[#allocation5 + $0x1c0] sm:$0xff]
        %v441 = vld [vmem:[#allocation5 + $0x1c8] sm:$0xff]
        %v442 = vld [vmem:[#allocation5 + $0x1d0] sm:$0xff]
        %v443 = vld [vmem:[#allocation5 + $0x1d8] sm:$0xff]
        %v444 = vld [vmem:[#allocation5 + $0x1e0] sm:$0xff]
        %v445 = vld [vmem:[#allocation5 + $0x1e8] sm:$0xff]
        %v446 = vld [vmem:[#allocation5 + $0x1f0] sm:$0xff]
        %v447 = vld [vmem:[#allocation5 + $0x1f8] sm:$0xff]
        %v448 = vld [vmem:[#allocation5 + $0x200] sm:$0xff]
        %v449 = vld [vmem:[#allocation5 + $0x208] sm:$0xff]
        %v450 = vld [vmem:[#allocation5 + $0x210] sm:$0xff]
        %v451 = vld [vmem:[#allocation5 + $0x218] sm:$0xff]
        %v452 = vld [vmem:[#allocation5 + $0x220] sm:$0xff]
        %v453 = vld [vmem:[#allocation5 + $0x228] sm:$0xff]
        %v454 = vld [vmem:[#allocation5 + $0x230] sm:$0xff]
        %v455 = vld [vmem:[#allocation5 + $0x238] sm:$0xff]
        %v456 = vld [vmem:[#allocation5 + $0x240] sm:$0xff]
        %v457 = vld [vmem:[#allocation5 + $0x248] sm:$0xff]
        %v458 = vld [vmem:[#allocation5 + $0x250] sm:$0xff]
        %v459 = vld [vmem:[#allocation5 + $0x258] sm:$0xff]
        %v460 = vld [vmem:[#allocation5 + $0x260] sm:$0xff]
        %v461 = vld [vmem:[#allocation5 + $0x268] sm:$0xff]
        %v462 = vld [vmem:[#allocation5 + $0x270] sm:$0xff]
        %v463 = vld [vmem:[#allocation5 + $0x278] sm:$0xff]
        %v464 = vld [vmem:[#allocation5 + $0x280] sm:$0xff]
        %v465 = vld [vmem:[#allocation5 + $0x288] sm:$0xff]
        %v466 = vld [vmem:[#allocation5 + $0x290] sm:$0xff]
        %v467 = vld [vmem:[#allocation5 + $0x298] sm:$0xff]
        %v468 = vld [vmem:[#allocation5 + $0x2a0] sm:$0xff]
        %v469 = vld [vmem:[#allocation5 + $0x2a8] sm:$0xff]
        %v470 = vld [vmem:[#allocation5 + $0x2b0] sm:$0xff]
        %v471 = vld [vmem:[#allocation5 + $0x2b8] sm:$0xff]
        %v472 = vld [vmem:[#allocation5 + $0x2c0] sm:$0xff]
        %v473 = vld [vmem:[#allocation5 + $0x2c8] sm:$0xff]
        %v474 = vld [vmem:[#allocation5 + $0x2d0] sm:$0xff]
        %v475 = vld [vmem:[#allocation5 + $0x2d8] sm:$0xff]
        %v476 = vld [vmem:[#allocation5 + $0x2e0] sm:$0xff]
        %v477 = vld [vmem:[#allocation5 + $0x2e8] sm:$0xff]
        %v478 = vld [vmem:[#allocation5 + $0x2f0] sm:$0xff]
        %v479 = vld [vmem:[#allocation5 + $0x2f8] sm:$0xff]
        %v480 = vld [vmem:[#allocation5 + $0x300] sm:$0xff]
        %v481 = vld [vmem:[#allocation5 + $0x308] sm:$0xff]
        %v482 = vld [vmem:[#allocation5 + $0x310] sm:$0xff]
        %v483 = vld [vmem:[#allocation5 + $0x318] sm:$0xff]
        %v484 = vld [vmem:[#allocation5 + $0x320] sm:$0xff]
        %v485 = vld [vmem:[#allocation5 + $0x328] sm:$0xff]
        %v486 = vld [vmem:[#allocation5 + $0x330] sm:$0xff]
        %v487 = vld [vmem:[#allocation5 + $0x338] sm:$0xff]
        %v488 = vld [vmem:[#allocation5 + $0x340] sm:$0xff]
        %v489 = vld [vmem:[#allocation5 + $0x348] sm:$0xff]
        %v490 = vld [vmem:[#allocation5 + $0x350] sm:$0xff]
        %v491 = vld [vmem:[#allocation5 + $0x358] sm:$0xff]
        %v492 = vld [vmem:[#allocation5 + $0x360] sm:$0xff]
        %v493 = vld [vmem:[#allocation5 + $0x368] sm:$0xff]
        %v494 = vld [vmem:[#allocation5 + $0x370] sm:$0xff]
        %v495 = vld [vmem:[#allocation5 + $0x378] sm:$0xff]
        %v496 = vld [vmem:[#allocation5 + $0x380] sm:$0xff]
        %v497 = vld [vmem:[#allocation5 + $0x388] sm:$0xff]
        %v498 = vld [vmem:[#allocation5 + $0x390] sm:$0xff]
        %v499 = vld [vmem:[#allocation5 + $0x398] sm:$0xff]
        %v500 = vld [vmem:[#allocation5 + $0x3a0] sm:$0xff]
        %v501 = vld [vmem:[#allocation5 + $0x3a8] sm:$0xff]
        %v502 = vld [vmem:[#allocation5 + $0x3b0] sm:$0xff]
        %v503 = vld [vmem:[#allocation5 + $0x3b8] sm:$0xff]
        %v504 = vld [vmem:[#allocation5 + $0x3c0] sm:$0xff]
        %v505 = vld [vmem:[#allocation5 + $0x3c8] sm:$0xff]
        %v506 = vld [vmem:[#allocation5 + $0x3d0] sm:$0xff]
        %v507 = vld [vmem:[#allocation5 + $0x3d8] sm:$0xff]
        %v508 = vld [vmem:[#allocation5 + $0x3e0] sm:$0xff]
        %v509 = vld [vmem:[#allocation5 + $0x3e8] sm:$0xff]
        %v510 = vld [vmem:[#allocation5 + $0x3f0] sm:$0xff]
        %v511 = vld [vmem:[#allocation5 + $0x3f8] sm:$0xff]
        %v512 = vld [vmem:[#allocation7] sm:$0xf]
        %v514 = vlaneseq
        %v515 = vshrl.u32 %v514, 7
        %v516 = vsub.s32 0, %v515
        %v517 = vrot.slane %v512, %v516
        %v518 = vlaneseq
        %v519 = vshrl.u32 %v518, 7
        %v520 = vsub.s32 1, %v519
        %v521 = vrot.slane %v512, %v520
        %v522 = vlaneseq
        %v523 = vshrl.u32 %v522, 7
        %v524 = vsub.s32 2, %v523
        %v525 = vrot.slane %v512, %v524
        %v526 = vlaneseq
        %v527 = vshrl.u32 %v526, 7
        %v528 = vsub.s32 3, %v527
        %v529 = vrot.slane %v512, %v528
        %v662 = vunpack.c.l.b16 %v384
        %v663 = vunpack.c.h.b16 %v384
        %v664 = vunpack.c.l.b16 %v385
        %v665 = vunpack.c.h.b16 %v385
        %v666 = vunpack.c.l.b16 %v386
        %v667 = vunpack.c.h.b16 %v386
        %v668 = vunpack.c.l.b16 %v387
        %v669 = vunpack.c.h.b16 %v387
        %v670 = vunpack.c.l.b16 %v388
        %v671 = vunpack.c.h.b16 %v388
        %v672 = vunpack.c.l.b16 %v389
        %v673 = vunpack.c.h.b16 %v389
        %v674 = vunpack.c.l.b16 %v390
        %v675 = vunpack.c.h.b16 %v390
        %v676 = vunpack.c.l.b16 %v391
        %v677 = vunpack.c.h.b16 %v391
        %v678 = vunpack.c.l.b16 %v392
        %v679 = vunpack.c.h.b16 %v392
        %v680 = vunpack.c.l.b16 %v393
        %v681 = vunpack.c.h.b16 %v393
        %v682 = vunpack.c.l.b16 %v394
        %v683 = vunpack.c.h.b16 %v394
        %v684 = vunpack.c.l.b16 %v395
        %v685 = vunpack.c.h.b16 %v395
        %v686 = vunpack.c.l.b16 %v396
        %v687 = vunpack.c.h.b16 %v396
        %v688 = vunpack.c.l.b16 %v397
        %v689 = vunpack.c.h.b16 %v397
        %v690 = vunpack.c.l.b16 %v398
        %v691 = vunpack.c.h.b16 %v398
        %v692 = vunpack.c.l.b16 %v399
        %v693 = vunpack.c.h.b16 %v399
        %v694 = vunpack.c.l.b16 %v400
        %v695 = vunpack.c.h.b16 %v400
        %v696 = vunpack.c.l.b16 %v401
        %v697 = vunpack.c.h.b16 %v401
        %v698 = vunpack.c.l.b16 %v402
        %v699 = vunpack.c.h.b16 %v402
        %v700 = vunpack.c.l.b16 %v403
        %v701 = vunpack.c.h.b16 %v403
        %v702 = vunpack.c.l.b16 %v404
        %v703 = vunpack.c.h.b16 %v404
        %v704 = vunpack.c.l.b16 %v405
        %v705 = vunpack.c.h.b16 %v405
        %v706 = vunpack.c.l.b16 %v406
        %v707 = vunpack.c.h.b16 %v406
        %v708 = vunpack.c.l.b16 %v407
        %v709 = vunpack.c.h.b16 %v407
        %v710 = vunpack.c.l.b16 %v408
        %v711 = vunpack.c.h.b16 %v408
        %v712 = vunpack.c.l.b16 %v409
        %v713 = vunpack.c.h.b16 %v409
        %v714 = vunpack.c.l.b16 %v410
        %v715 = vunpack.c.h.b16 %v410
        %v716 = vunpack.c.l.b16 %v411
        %v717 = vunpack.c.h.b16 %v411
        %v718 = vunpack.c.l.b16 %v412
        %v719 = vunpack.c.h.b16 %v412
        %v720 = vunpack.c.l.b16 %v413
        %v721 = vunpack.c.h.b16 %v413
        %v722 = vunpack.c.l.b16 %v414
        %v723 = vunpack.c.h.b16 %v414
        %v724 = vunpack.c.l.b16 %v415
        %v725 = vunpack.c.h.b16 %v415
        %v726 = vunpack.c.l.b16 %v416
        %v727 = vunpack.c.h.b16 %v416
        %v728 = vunpack.c.l.b16 %v417
        %v729 = vunpack.c.h.b16 %v417
        %v730 = vunpack.c.l.b16 %v418
        %v731 = vunpack.c.h.b16 %v418
        %v732 = vunpack.c.l.b16 %v419
        %v733 = vunpack.c.h.b16 %v419
        %v734 = vunpack.c.l.b16 %v420
        %v735 = vunpack.c.h.b16 %v420
        %v736 = vunpack.c.l.b16 %v421
        %v737 = vunpack.c.h.b16 %v421
        %v738 = vunpack.c.l.b16 %v422
        %v739 = vunpack.c.h.b16 %v422
        %v740 = vunpack.c.l.b16 %v423
        %v741 = vunpack.c.h.b16 %v423
        %v742 = vunpack.c.l.b16 %v424
        %v743 = vunpack.c.h.b16 %v424
        %v744 = vunpack.c.l.b16 %v425
        %v745 = vunpack.c.h.b16 %v425
        %v746 = vunpack.c.l.b16 %v426
        %v747 = vunpack.c.h.b16 %v426
        %v748 = vunpack.c.l.b16 %v427
        %v749 = vunpack.c.h.b16 %v427
        %v750 = vunpack.c.l.b16 %v428
        %v751 = vunpack.c.h.b16 %v428
        %v752 = vunpack.c.l.b16 %v429
        %v753 = vunpack.c.h.b16 %v429
        %v754 = vunpack.c.l.b16 %v430
        %v755 = vunpack.c.h.b16 %v430
        %v756 = vunpack.c.l.b16 %v431
        %v757 = vunpack.c.h.b16 %v431
        %v758 = vunpack.c.l.b16 %v432
        %v759 = vunpack.c.h.b16 %v432
        %v760 = vunpack.c.l.b16 %v433
        %v761 = vunpack.c.h.b16 %v433
        %v762 = vunpack.c.l.b16 %v434
        %v763 = vunpack.c.h.b16 %v434
        %v764 = vunpack.c.l.b16 %v435
        %v765 = vunpack.c.h.b16 %v435
        %v766 = vunpack.c.l.b16 %v436
        %v767 = vunpack.c.h.b16 %v436
        %v768 = vunpack.c.l.b16 %v437
        %v769 = vunpack.c.h.b16 %v437
        %v770 = vunpack.c.l.b16 %v438
        %v771 = vunpack.c.h.b16 %v438
        %v772 = vunpack.c.l.b16 %v439
        %v773 = vunpack.c.h.b16 %v439
        %v774 = vunpack.c.l.b16 %v440
        %v775 = vunpack.c.h.b16 %v440
        %v776 = vunpack.c.l.b16 %v441
        %v777 = vunpack.c.h.b16 %v441
        %v778 = vunpack.c.l.b16 %v442
        %v779 = vunpack.c.h.b16 %v442
        %v780 = vunpack.c.l.b16 %v443
        %v781 = vunpack.c.h.b16 %v443
        %v782 = vunpack.c.l.b16 %v444
        %v783 = vunpack.c.h.b16 %v444
        %v784 = vunpack.c.l.b16 %v445
        %v785 = vunpack.c.h.b16 %v445
        %v786 = vunpack.c.l.b16 %v446
        %v787 = vunpack.c.h.b16 %v446
        %v788 = vunpack.c.l.b16 %v447
        %v789 = vunpack.c.h.b16 %v447
        %v790 = vunpack.c.l.b16 %v448
        %v791 = vunpack.c.h.b16 %v448
        %v792 = vunpack.c.l.b16 %v449
        %v793 = vunpack.c.h.b16 %v449
        %v794 = vunpack.c.l.b16 %v450
        %v795 = vunpack.c.h.b16 %v450
        %v796 = vunpack.c.l.b16 %v451
        %v797 = vunpack.c.h.b16 %v451
        %v798 = vunpack.c.l.b16 %v452
        %v799 = vunpack.c.h.b16 %v452
        %v800 = vunpack.c.l.b16 %v453
        %v801 = vunpack.c.h.b16 %v453
        %v802 = vunpack.c.l.b16 %v454
        %v803 = vunpack.c.h.b16 %v454
        %v804 = vunpack.c.l.b16 %v455
        %v805 = vunpack.c.h.b16 %v455
        %v806 = vunpack.c.l.b16 %v456
        %v807 = vunpack.c.h.b16 %v456
        %v808 = vunpack.c.l.b16 %v457
        %v809 = vunpack.c.h.b16 %v457
        %v810 = vunpack.c.l.b16 %v458
        %v811 = vunpack.c.h.b16 %v458
        %v812 = vunpack.c.l.b16 %v459
        %v813 = vunpack.c.h.b16 %v459
        %v814 = vunpack.c.l.b16 %v460
        %v815 = vunpack.c.h.b16 %v460
        %v816 = vunpack.c.l.b16 %v461
        %v817 = vunpack.c.h.b16 %v461
        %v818 = vunpack.c.l.b16 %v462
        %v819 = vunpack.c.h.b16 %v462
        %v820 = vunpack.c.l.b16 %v463
        %v821 = vunpack.c.h.b16 %v463
        %v822 = vunpack.c.l.b16 %v464
        %v823 = vunpack.c.h.b16 %v464
        %v824 = vunpack.c.l.b16 %v465
        %v825 = vunpack.c.h.b16 %v465
        %v826 = vunpack.c.l.b16 %v466
        %v827 = vunpack.c.h.b16 %v466
        %v828 = vunpack.c.l.b16 %v467
        %v829 = vunpack.c.h.b16 %v467
        %v830 = vunpack.c.l.b16 %v468
        %v831 = vunpack.c.h.b16 %v468
        %v832 = vunpack.c.l.b16 %v469
        %v833 = vunpack.c.h.b16 %v469
        %v834 = vunpack.c.l.b16 %v470
        %v835 = vunpack.c.h.b16 %v470
        %v836 = vunpack.c.l.b16 %v471
        %v837 = vunpack.c.h.b16 %v471
        %v838 = vunpack.c.l.b16 %v472
        %v839 = vunpack.c.h.b16 %v472
        %v840 = vunpack.c.l.b16 %v473
        %v841 = vunpack.c.h.b16 %v473
        %v842 = vunpack.c.l.b16 %v474
        %v843 = vunpack.c.h.b16 %v474
        %v844 = vunpack.c.l.b16 %v475
        %v845 = vunpack.c.h.b16 %v475
        %v846 = vunpack.c.l.b16 %v476
        %v847 = vunpack.c.h.b16 %v476
        %v848 = vunpack.c.l.b16 %v477
        %v849 = vunpack.c.h.b16 %v477
        %v850 = vunpack.c.l.b16 %v478
        %v851 = vunpack.c.h.b16 %v478
        %v852 = vunpack.c.l.b16 %v479
        %v853 = vunpack.c.h.b16 %v479
        %v854 = vunpack.c.l.b16 %v480
        %v855 = vunpack.c.h.b16 %v480
        %v856 = vunpack.c.l.b16 %v481
        %v857 = vunpack.c.h.b16 %v481
        %v858 = vunpack.c.l.b16 %v482
        %v859 = vunpack.c.h.b16 %v482
        %v860 = vunpack.c.l.b16 %v483
        %v861 = vunpack.c.h.b16 %v483
        %v862 = vunpack.c.l.b16 %v484
        %v863 = vunpack.c.h.b16 %v484
        %v864 = vunpack.c.l.b16 %v485
        %v865 = vunpack.c.h.b16 %v485
        %v866 = vunpack.c.l.b16 %v486
        %v867 = vunpack.c.h.b16 %v486
        %v868 = vunpack.c.l.b16 %v487
        %v869 = vunpack.c.h.b16 %v487
        %v870 = vunpack.c.l.b16 %v488
        %v871 = vunpack.c.h.b16 %v488
        %v872 = vunpack.c.l.b16 %v489
        %v873 = vunpack.c.h.b16 %v489
        %v874 = vunpack.c.l.b16 %v490
        %v875 = vunpack.c.h.b16 %v490
        %v876 = vunpack.c.l.b16 %v491
        %v877 = vunpack.c.h.b16 %v491
        %v878 = vunpack.c.l.b16 %v492
        %v879 = vunpack.c.h.b16 %v492
        %v880 = vunpack.c.l.b16 %v493
        %v881 = vunpack.c.h.b16 %v493
        %v882 = vunpack.c.l.b16 %v494
        %v883 = vunpack.c.h.b16 %v494
        %v884 = vunpack.c.l.b16 %v495
        %v885 = vunpack.c.h.b16 %v495
        %v886 = vunpack.c.l.b16 %v496
        %v887 = vunpack.c.h.b16 %v496
        %v888 = vunpack.c.l.b16 %v497
        %v889 = vunpack.c.h.b16 %v497
        %v890 = vunpack.c.l.b16 %v498
        %v891 = vunpack.c.h.b16 %v498
        %v892 = vunpack.c.l.b16 %v499
        %v893 = vunpack.c.h.b16 %v499
        %v894 = vunpack.c.l.b16 %v500
        %v895 = vunpack.c.h.b16 %v500
        %v896 = vunpack.c.l.b16 %v501
        %v897 = vunpack.c.h.b16 %v501
        %v898 = vunpack.c.l.b16 %v502
        %v899 = vunpack.c.h.b16 %v502
        %v900 = vunpack.c.l.b16 %v503
        %v901 = vunpack.c.h.b16 %v503
        %v902 = vunpack.c.l.b16 %v504
        %v903 = vunpack.c.h.b16 %v504
        %v904 = vunpack.c.l.b16 %v505
        %v905 = vunpack.c.h.b16 %v505
        %v906 = vunpack.c.l.b16 %v506
        %v907 = vunpack.c.h.b16 %v506
        %v908 = vunpack.c.l.b16 %v507
        %v909 = vunpack.c.h.b16 %v507
        %v910 = vunpack.c.l.b16 %v508
        %v911 = vunpack.c.h.b16 %v508
        %v912 = vunpack.c.l.b16 %v509
        %v913 = vunpack.c.h.b16 %v509
        %v914 = vunpack.c.l.b16 %v510
        %v915 = vunpack.c.h.b16 %v510
        %v916 = vunpack.c.l.b16 %v511
        %v917 = vunpack.c.h.b16 %v511
        %v918 = vpack.c.b16 %v666, %v662
        %v919 = vpack.c.b16 %v667, %v663
        %v920 = vpack.c.b16 %v668, %v664
        %v921 = vpack.c.b16 %v669, %v665
        %v922 = vpack.c.b16 %v674, %v670
        %v923 = vpack.c.b16 %v675, %v671
        %v924 = vpack.c.b16 %v676, %v672
        %v925 = vpack.c.b16 %v677, %v673
        %v926 = vpack.c.b16 %v682, %v678
        %v927 = vpack.c.b16 %v683, %v679
        %v928 = vpack.c.b16 %v684, %v680
        %v929 = vpack.c.b16 %v685, %v681
        %v930 = vpack.c.b16 %v690, %v686
        %v931 = vpack.c.b16 %v691, %v687
        %v932 = vpack.c.b16 %v692, %v688
        %v933 = vpack.c.b16 %v693, %v689
        %v934 = vpack.c.b16 %v698, %v694
        %v935 = vpack.c.b16 %v699, %v695
        %v936 = vpack.c.b16 %v700, %v696
        %v937 = vpack.c.b16 %v701, %v697
        %v938 = vpack.c.b16 %v706, %v702
        %v939 = vpack.c.b16 %v707, %v703
        %v940 = vpack.c.b16 %v708, %v704
        %v941 = vpack.c.b16 %v709, %v705
        %v942 = vpack.c.b16 %v714, %v710
        %v943 = vpack.c.b16 %v715, %v711
        %v944 = vpack.c.b16 %v716, %v712
        %v945 = vpack.c.b16 %v717, %v713
        %v946 = vpack.c.b16 %v722, %v718
        %v947 = vpack.c.b16 %v723, %v719
        %v948 = vpack.c.b16 %v724, %v720
        %v949 = vpack.c.b16 %v725, %v721
        %v950 = vpack.c.b16 %v730, %v726
        %v951 = vpack.c.b16 %v731, %v727
        %v952 = vpack.c.b16 %v732, %v728
        %v953 = vpack.c.b16 %v733, %v729
        %v954 = vpack.c.b16 %v738, %v734
        %v955 = vpack.c.b16 %v739, %v735
        %v956 = vpack.c.b16 %v740, %v736
        %v957 = vpack.c.b16 %v741, %v737
        %v958 = vpack.c.b16 %v746, %v742
        %v959 = vpack.c.b16 %v747, %v743
        %v960 = vpack.c.b16 %v748, %v744
        %v961 = vpack.c.b16 %v749, %v745
        %v962 = vpack.c.b16 %v754, %v750
        %v963 = vpack.c.b16 %v755, %v751
        %v964 = vpack.c.b16 %v756, %v752
        %v965 = vpack.c.b16 %v757, %v753
        %v966 = vpack.c.b16 %v762, %v758
        %v967 = vpack.c.b16 %v763, %v759
        %v968 = vpack.c.b16 %v764, %v760
        %v969 = vpack.c.b16 %v765, %v761
        %v970 = vpack.c.b16 %v770, %v766
        %v971 = vpack.c.b16 %v771, %v767
        %v972 = vpack.c.b16 %v772, %v768
        %v973 = vpack.c.b16 %v773, %v769
        %v974 = vpack.c.b16 %v778, %v774
        %v975 = vpack.c.b16 %v779, %v775
        %v976 = vpack.c.b16 %v780, %v776
        %v977 = vpack.c.b16 %v781, %v777
        %v978 = vpack.c.b16 %v786, %v782
        %v979 = vpack.c.b16 %v787, %v783
        %v980 = vpack.c.b16 %v788, %v784
        %v981 = vpack.c.b16 %v789, %v785
        %v982 = vpack.c.b16 %v794, %v790
        %v983 = vpack.c.b16 %v795, %v791
        %v984 = vpack.c.b16 %v796, %v792
        %v985 = vpack.c.b16 %v797, %v793
        %v986 = vpack.c.b16 %v802, %v798
        %v987 = vpack.c.b16 %v803, %v799
        %v988 = vpack.c.b16 %v804, %v800
        %v989 = vpack.c.b16 %v805, %v801
        %v990 = vpack.c.b16 %v810, %v806
        %v991 = vpack.c.b16 %v811, %v807
        %v992 = vpack.c.b16 %v812, %v808
        %v993 = vpack.c.b16 %v813, %v809
        %v994 = vpack.c.b16 %v818, %v814
        %v995 = vpack.c.b16 %v819, %v815
        %v996 = vpack.c.b16 %v820, %v816
        %v997 = vpack.c.b16 %v821, %v817
        %v998 = vpack.c.b16 %v826, %v822
        %v999 = vpack.c.b16 %v827, %v823
        %v1000 = vpack.c.b16 %v828, %v824
        %v1001 = vpack.c.b16 %v829, %v825
        %v1002 = vpack.c.b16 %v834, %v830
        %v1003 = vpack.c.b16 %v835, %v831
        %v1004 = vpack.c.b16 %v836, %v832
        %v1005 = vpack.c.b16 %v837, %v833
        %v1006 = vpack.c.b16 %v842, %v838
        %v1007 = vpack.c.b16 %v843, %v839
        %v1008 = vpack.c.b16 %v844, %v840
        %v1009 = vpack.c.b16 %v845, %v841
        %v1010 = vpack.c.b16 %v850, %v846
        %v1011 = vpack.c.b16 %v851, %v847
        %v1012 = vpack.c.b16 %v852, %v848
        %v1013 = vpack.c.b16 %v853, %v849
        %v1014 = vpack.c.b16 %v858, %v854
        %v1015 = vpack.c.b16 %v859, %v855
        %v1016 = vpack.c.b16 %v860, %v856
        %v1017 = vpack.c.b16 %v861, %v857
        %v1018 = vpack.c.b16 %v866, %v862
        %v1019 = vpack.c.b16 %v867, %v863
        %v1020 = vpack.c.b16 %v868, %v864
        %v1021 = vpack.c.b16 %v869, %v865
        %v1022 = vpack.c.b16 %v874, %v870
        %v1023 = vpack.c.b16 %v875, %v871
        %v1024 = vpack.c.b16 %v876, %v872
        %v1025 = vpack.c.b16 %v877, %v873
        %v1026 = vpack.c.b16 %v882, %v878
        %v1027 = vpack.c.b16 %v883, %v879
        %v1028 = vpack.c.b16 %v884, %v880
        %v1029 = vpack.c.b16 %v885, %v881
        %v1030 = vpack.c.b16 %v890, %v886
        %v1031 = vpack.c.b16 %v891, %v887
        %v1032 = vpack.c.b16 %v892, %v888
        %v1033 = vpack.c.b16 %v893, %v889
        %v1034 = vpack.c.b16 %v898, %v894
        %v1035 = vpack.c.b16 %v899, %v895
        %v1036 = vpack.c.b16 %v900, %v896
        %v1037 = vpack.c.b16 %v901, %v897
        %v1038 = vpack.c.b16 %v906, %v902
        %v1039 = vpack.c.b16 %v907, %v903
        %v1040 = vpack.c.b16 %v908, %v904
        %v1041 = vpack.c.b16 %v909, %v905
        %v1042 = vpack.c.b16 %v914, %v910
        %v1043 = vpack.c.b16 %v915, %v911
        %v1044 = vpack.c.b16 %v916, %v912
        %v1045 = vpack.c.b16 %v917, %v913
        %1174 = vmatprep.subr.bf16.mxu0 %v947
        %1175 = vmatpush1.bf16.msra.mxu0 %v946
        %1176 = vmatprep.subr.bf16.mxu0 %v943
        %1177 = vmatpush1.bf16.msra.mxu0 %v942
        %1178 = vmatprep.subr.bf16.mxu0 %v939
        %1179 = vmatpush1.bf16.msra.mxu0 %v938
        %1180 = vmatprep.subr.bf16.mxu0 %v935
        %1181 = vmatpush1.bf16.msra.mxu0 %v934
        %1182 = vmatprep.subr.bf16.mxu0 %v931
        %1183 = vmatpush1.bf16.msra.mxu0 %v930
        %1184 = vmatprep.subr.bf16.mxu0 %v927
        %1185 = vmatpush1.bf16.msra.mxu0 %v926
        %1186 = vmatprep.subr.bf16.mxu0 %v923
        %1187 = vmatpush1.bf16.msra.mxu0 %v922
        %1188 = vmatprep.subr.bf16.mxu0 %v919
        %1189 = vmatpush1.bf16.msra.mxu0 %v918
        %1190 = vmatprep.subr.bf16.mxu0 %v979
        %1191 = vmatpush2.bf16.msra.mxu0 %v978
        %1192 = vmatprep.subr.bf16.mxu0 %v975
        %1193 = vmatpush2.bf16.msra.mxu0 %v974
        %1194 = vmatprep.subr.bf16.mxu0 %v971
        %1195 = vmatpush2.bf16.msra.mxu0 %v970
        %1196 = vmatprep.subr.bf16.mxu0 %v967
        %1197 = vmatpush2.bf16.msra.mxu0 %v966
        %1198 = vmatprep.subr.bf16.mxu0 %v963
        %1199 = vmatpush2.bf16.msra.mxu0 %v962
        %1200 = vmatprep.subr.bf16.mxu0 %v959
        %1201 = vmatpush2.bf16.msra.mxu0 %v958
        %1202 = vmatprep.subr.bf16.mxu0 %v955
        %1203 = vmatpush2.bf16.msra.mxu0 %v954
        %1204 = vmatprep.subr.bf16.mxu0 %v951
        %1205 = vmatpush2.bf16.msra.mxu0 %v950
        %1206 = vmatprep.mubr.bf16.mxu0 %v353
        %1207 = vmatmul.mubr.bf16.gmra.mxu0 %v352
        %v1208 = vpop.f32.mrf.mxu0
        %v1209 = vadd.f32 %v517, %v1208
        %v1210 = vpop.f32.mrf.mxu0
        %v1211 = vadd.f32 %v521, %v1210
        %v1212 = vpop.f32.mrf.mxu0
        %v1213 = vadd.f32 %v517, %v1212
        %v1214 = vpop.f32.mrf.mxu0
        %v1215 = vadd.f32 %v521, %v1214
        %1216 = vmatprep.mubr.bf16.mxu0 %v357
        %1217 = vmatmul.mubr.bf16.gmra.mxu0 %v356
        %v1218 = vpop.f32.mrf.mxu0
        %v1219 = vadd.f32 %v517, %v1218
        %v1220 = vpop.f32.mrf.mxu0
        %v1221 = vadd.f32 %v521, %v1220
        %v1222 = vpop.f32.mrf.mxu0
        %v1223 = vadd.f32 %v517, %v1222
        %v1224 = vpop.f32.mrf.mxu0
        %v1225 = vadd.f32 %v521, %v1224
        %1226 = vmatprep.mubr.bf16.mxu0 %v361
        %1227 = vmatmul.mubr.bf16.gmra.mxu0 %v360
        %v1228 = vpop.f32.mrf.mxu0
        %v1229 = vadd.f32 %v517, %v1228
        %v1230 = vpop.f32.mrf.mxu0
        %v1231 = vadd.f32 %v521, %v1230
        %v1232 = vpop.f32.mrf.mxu0
        %v1233 = vadd.f32 %v517, %v1232
        %v1234 = vpop.f32.mrf.mxu0
        %v1235 = vadd.f32 %v521, %v1234
        %1236 = vmatprep.mubr.bf16.mxu0 %v365
        %1237 = vmatmul.mubr.bf16.gmra.mxu0 %v364
        %v1238 = vpop.f32.mrf.mxu0
        %v1239 = vadd.f32 %v517, %v1238
        %v1240 = vpop.f32.mrf.mxu0
        %v1241 = vadd.f32 %v521, %v1240
        %v1242 = vpop.f32.mrf.mxu0
        %v1243 = vadd.f32 %v517, %v1242
        %v1244 = vpop.f32.mrf.mxu0
        %v1245 = vadd.f32 %v521, %v1244
        %1246 = vmatprep.mubr.bf16.mxu0 %v369
        %1247 = vmatmul.mubr.bf16.gmra.mxu0 %v368
        %v1248 = vpop.f32.mrf.mxu0
        %v1249 = vadd.f32 %v517, %v1248
        %v1250 = vpop.f32.mrf.mxu0
        %v1251 = vadd.f32 %v521, %v1250
        %v1252 = vpop.f32.mrf.mxu0
        %v1253 = vadd.f32 %v517, %v1252
        %v1254 = vpop.f32.mrf.mxu0
        %v1255 = vadd.f32 %v521, %v1254
        %1256 = vmatprep.mubr.bf16.mxu0 %v373
        %1257 = vmatmul.mubr.bf16.gmra.mxu0 %v372
        %v1258 = vpop.f32.mrf.mxu0
        %v1259 = vadd.f32 %v517, %v1258
        %v1260 = vpop.f32.mrf.mxu0
        %v1261 = vadd.f32 %v521, %v1260
        %v1262 = vpop.f32.mrf.mxu0
        %v1263 = vadd.f32 %v517, %v1262
        %v1264 = vpop.f32.mrf.mxu0
        %v1265 = vadd.f32 %v521, %v1264
        %1266 = vmatprep.mubr.bf16.mxu0 %v377
        %1267 = vmatmul.mubr.bf16.gmra.mxu0 %v376
        %v1268 = vpop.f32.mrf.mxu0
        %v1269 = vadd.f32 %v517, %v1268
        %v1270 = vpop.f32.mrf.mxu0
        %v1271 = vadd.f32 %v521, %v1270
        %v1272 = vpop.f32.mrf.mxu0
        %v1273 = vadd.f32 %v517, %v1272
        %v1274 = vpop.f32.mrf.mxu0
        %v1275 = vadd.f32 %v521, %v1274
        %1276 = vmatprep.mubr.bf16.mxu0 %v381
        %1277 = vmatmul.mubr.bf16.gmra.mxu0 %v380
        %v1278 = vpop.f32.mrf.mxu0
        %v1279 = vadd.f32 %v517, %v1278
        %v1280 = vpop.f32.mrf.mxu0
        %v1281 = vadd.f32 %v521, %v1280
        %v1282 = vpop.f32.mrf.mxu0
        %v1283 = vadd.f32 %v517, %v1282
        %v1284 = vpop.f32.mrf.mxu0
        %v1285 = vadd.f32 %v521, %v1284
        %1286 = vdwg.mxu0
        %1287 = vmatprep.subr.bf16.mxu0 %v1011
        %1288 = vmatpush1.bf16.msra.mxu0 %v1010
        %1289 = vmatprep.subr.bf16.mxu0 %v1007
        %1290 = vmatpush1.bf16.msra.mxu0 %v1006
        %1291 = vmatprep.subr.bf16.mxu0 %v1003
        %1292 = vmatpush1.bf16.msra.mxu0 %v1002
        %1293 = vmatprep.subr.bf16.mxu0 %v999
        %1294 = vmatpush1.bf16.msra.mxu0 %v998
        %1295 = vmatprep.subr.bf16.mxu0 %v995
        %1296 = vmatpush1.bf16.msra.mxu0 %v994
        %1297 = vmatprep.subr.bf16.mxu0 %v991
        %1298 = vmatpush1.bf16.msra.mxu0 %v990
        %1299 = vmatprep.subr.bf16.mxu0 %v987
        %1300 = vmatpush1.bf16.msra.mxu0 %v986
        %1301 = vmatprep.subr.bf16.mxu0 %v983
        %1302 = vmatpush1.bf16.msra.mxu0 %v982
        %1303 = vmatprep.subr.bf16.mxu0 %v1043
        %1304 = vmatpush2.bf16.msra.mxu0 %v1042
        %1305 = vmatprep.subr.bf16.mxu0 %v1039
        %1306 = vmatpush2.bf16.msra.mxu0 %v1038
        %1307 = vmatprep.subr.bf16.mxu0 %v1035
        %1308 = vmatpush2.bf16.msra.mxu0 %v1034
        %1309 = vmatprep.subr.bf16.mxu0 %v1031
        %1310 = vmatpush2.bf16.msra.mxu0 %v1030
        %1311 = vmatprep.subr.bf16.mxu0 %v1027
        %1312 = vmatpush2.bf16.msra.mxu0 %v1026
        %1313 = vmatprep.subr.bf16.mxu0 %v1023
        %1314 = vmatpush2.bf16.msra.mxu0 %v1022
        %1315 = vmatprep.subr.bf16.mxu0 %v1019
        %1316 = vmatpush2.bf16.msra.mxu0 %v1018
        %1317 = vmatprep.subr.bf16.mxu0 %v1015
        %1318 = vmatpush2.bf16.msra.mxu0 %v1014
        %1319 = vmatprep.mubr.bf16.mxu0 %v355
        %1320 = vmatmul.mubr.bf16.gmra.mxu0 %v354
        %v1321 = vpop.f32.mrf.mxu0
        %v1322 = vadd.f32 %v1209, %v1321
        %v1323 = vpop.f32.mrf.mxu0
        %v1324 = vadd.f32 %v1211, %v1323
        %v1325 = vpop.f32.mrf.mxu0
        %v1326 = vadd.f32 %v1213, %v1325
        %v1327 = vpop.f32.mrf.mxu0
        %v1328 = vadd.f32 %v1215, %v1327
        %1329 = vmatprep.mubr.bf16.mxu0 %v359
        %1330 = vmatmul.mubr.bf16.gmra.mxu0 %v358
        %v1331 = vpop.f32.mrf.mxu0
        %v1332 = vadd.f32 %v1219, %v1331
        %v1333 = vpop.f32.mrf.mxu0
        %v1334 = vadd.f32 %v1221, %v1333
        %v1335 = vpop.f32.mrf.mxu0
        %v1336 = vadd.f32 %v1223, %v1335
        %v1337 = vpop.f32.mrf.mxu0
        %v1338 = vadd.f32 %v1225, %v1337
        %1339 = vmatprep.mubr.bf16.mxu0 %v363
        %1340 = vmatmul.mubr.bf16.gmra.mxu0 %v362
        %v1341 = vpop.f32.mrf.mxu0
        %v1342 = vadd.f32 %v1229, %v1341
        %v1343 = vpop.f32.mrf.mxu0
        %v1344 = vadd.f32 %v1231, %v1343
        %v1345 = vpop.f32.mrf.mxu0
        %v1346 = vadd.f32 %v1233, %v1345
        %v1347 = vpop.f32.mrf.mxu0
        %v1348 = vadd.f32 %v1235, %v1347
        %1349 = vmatprep.mubr.bf16.mxu0 %v367
        %1350 = vmatmul.mubr.bf16.gmra.mxu0 %v366
        %v1351 = vpop.f32.mrf.mxu0
        %v1352 = vadd.f32 %v1239, %v1351
        %v1353 = vpop.f32.mrf.mxu0
        %v1354 = vadd.f32 %v1241, %v1353
        %v1355 = vpop.f32.mrf.mxu0
        %v1356 = vadd.f32 %v1243, %v1355
        %v1357 = vpop.f32.mrf.mxu0
        %v1358 = vadd.f32 %v1245, %v1357
        %1359 = vmatprep.mubr.bf16.mxu0 %v371
        %1360 = vmatmul.mubr.bf16.gmra.mxu0 %v370
        %v1361 = vpop.f32.mrf.mxu0
        %v1362 = vadd.f32 %v1249, %v1361
        %v1363 = vpop.f32.mrf.mxu0
        %v1364 = vadd.f32 %v1251, %v1363
        %v1365 = vpop.f32.mrf.mxu0
        %v1366 = vadd.f32 %v1253, %v1365
        %v1367 = vpop.f32.mrf.mxu0
        %v1368 = vadd.f32 %v1255, %v1367
        %1369 = vmatprep.mubr.bf16.mxu0 %v375
        %1370 = vmatmul.mubr.bf16.gmra.mxu0 %v374
        %v1371 = vpop.f32.mrf.mxu0
        %v1372 = vadd.f32 %v1259, %v1371
        %v1373 = vpop.f32.mrf.mxu0
        %v1374 = vadd.f32 %v1261, %v1373
        %v1375 = vpop.f32.mrf.mxu0
        %v1376 = vadd.f32 %v1263, %v1375
        %v1377 = vpop.f32.mrf.mxu0
        %v1378 = vadd.f32 %v1265, %v1377
        %1379 = vmatprep.mubr.bf16.mxu0 %v379
        %1380 = vmatmul.mubr.bf16.gmra.mxu0 %v378
        %v1381 = vpop.f32.mrf.mxu0
        %v1382 = vadd.f32 %v1269, %v1381
        %v1383 = vpop.f32.mrf.mxu0
        %v1384 = vadd.f32 %v1271, %v1383
        %v1385 = vpop.f32.mrf.mxu0
        %v1386 = vadd.f32 %v1273, %v1385
        %v1387 = vpop.f32.mrf.mxu0
        %v1388 = vadd.f32 %v1275, %v1387
        %1389 = vmatprep.mubr.bf16.mxu0 %v383
        %1390 = vmatmul.mubr.bf16.gmra.mxu0 %v382
        %v1391 = vpop.f32.mrf.mxu0
        %v1392 = vadd.f32 %v1279, %v1391
        %v1393 = vpop.f32.mrf.mxu0
        %v1394 = vadd.f32 %v1281, %v1393
        %v1395 = vpop.f32.mrf.mxu0
        %v1396 = vadd.f32 %v1283, %v1395
        %v1397 = vpop.f32.mrf.mxu0
        %v1398 = vadd.f32 %v1285, %v1397
        %1399 = vdwg.mxu0
        %1400 = vmatprep.subr.bf16.mxu0 %v949
        %1401 = vmatpush1.bf16.msra.mxu0 %v948
        %1402 = vmatprep.subr.bf16.mxu0 %v945
        %1403 = vmatpush1.bf16.msra.mxu0 %v944
        %1404 = vmatprep.subr.bf16.mxu0 %v941
        %1405 = vmatpush1.bf16.msra.mxu0 %v940
        %1406 = vmatprep.subr.bf16.mxu0 %v937
        %1407 = vmatpush1.bf16.msra.mxu0 %v936
        %1408 = vmatprep.subr.bf16.mxu0 %v933
        %1409 = vmatpush1.bf16.msra.mxu0 %v932
        %1410 = vmatprep.subr.bf16.mxu0 %v929
        %1411 = vmatpush1.bf16.msra.mxu0 %v928
        %1412 = vmatprep.subr.bf16.mxu0 %v925
        %1413 = vmatpush1.bf16.msra.mxu0 %v924
        %1414 = vmatprep.subr.bf16.mxu0 %v921
        %1415 = vmatpush1.bf16.msra.mxu0 %v920
        %1416 = vmatprep.subr.bf16.mxu0 %v981
        %1417 = vmatpush2.bf16.msra.mxu0 %v980
        %1418 = vmatprep.subr.bf16.mxu0 %v977
        %1419 = vmatpush2.bf16.msra.mxu0 %v976
        %1420 = vmatprep.subr.bf16.mxu0 %v973
        %1421 = vmatpush2.bf16.msra.mxu0 %v972
        %1422 = vmatprep.subr.bf16.mxu0 %v969
        %1423 = vmatpush2.bf16.msra.mxu0 %v968
        %1424 = vmatprep.subr.bf16.mxu0 %v965
        %1425 = vmatpush2.bf16.msra.mxu0 %v964
        %1426 = vmatprep.subr.bf16.mxu0 %v961
        %1427 = vmatpush2.bf16.msra.mxu0 %v960
        %1428 = vmatprep.subr.bf16.mxu0 %v957
        %1429 = vmatpush2.bf16.msra.mxu0 %v956
        %1430 = vmatprep.subr.bf16.mxu0 %v953
        %1431 = vmatpush2.bf16.msra.mxu0 %v952
        %1432 = vmatprep.mubr.bf16.mxu0 %v353
        %1433 = vmatmul.mubr.bf16.gmra.mxu0 %v352
        %v1434 = vpop.f32.mrf.mxu0
        %v1435 = vadd.f32 %v525, %v1434
        %v1436 = vpop.f32.mrf.mxu0
        %v1437 = vadd.f32 %v529, %v1436
        %v1438 = vpop.f32.mrf.mxu0
        %v1439 = vadd.f32 %v525, %v1438
        %v1440 = vpop.f32.mrf.mxu0
        %v1441 = vadd.f32 %v529, %v1440
        %1442 = vmatprep.mubr.bf16.mxu0 %v357
        %1443 = vmatmul.mubr.bf16.gmra.mxu0 %v356
        %v1444 = vpop.f32.mrf.mxu0
        %v1445 = vadd.f32 %v525, %v1444
        %v1446 = vpop.f32.mrf.mxu0
        %v1447 = vadd.f32 %v529, %v1446
        %v1448 = vpop.f32.mrf.mxu0
        %v1449 = vadd.f32 %v525, %v1448
        %v1450 = vpop.f32.mrf.mxu0
        %v1451 = vadd.f32 %v529, %v1450
        %1452 = vmatprep.mubr.bf16.mxu0 %v361
        %1453 = vmatmul.mubr.bf16.gmra.mxu0 %v360
        %v1454 = vpop.f32.mrf.mxu0
        %v1455 = vadd.f32 %v525, %v1454
        %v1456 = vpop.f32.mrf.mxu0
        %v1457 = vadd.f32 %v529, %v1456
        %v1458 = vpop.f32.mrf.mxu0
        %v1459 = vadd.f32 %v525, %v1458
        %v1460 = vpop.f32.mrf.mxu0
        %v1461 = vadd.f32 %v529, %v1460
        %1462 = vmatprep.mubr.bf16.mxu0 %v365
        %1463 = vmatmul.mubr.bf16.gmra.mxu0 %v364
        %v1464 = vpop.f32.mrf.mxu0
        %v1465 = vadd.f32 %v525, %v1464
        %v1466 = vpop.f32.mrf.mxu0
        %v1467 = vadd.f32 %v529, %v1466
        %v1468 = vpop.f32.mrf.mxu0
        %v1469 = vadd.f32 %v525, %v1468
        %v1470 = vpop.f32.mrf.mxu0
        %v1471 = vadd.f32 %v529, %v1470
        %1472 = vmatprep.mubr.bf16.mxu0 %v369
        %1473 = vmatmul.mubr.bf16.gmra.mxu0 %v368
        %v1474 = vpop.f32.mrf.mxu0
        %v1475 = vadd.f32 %v525, %v1474
        %v1476 = vpop.f32.mrf.mxu0
        %v1477 = vadd.f32 %v529, %v1476
        %v1478 = vpop.f32.mrf.mxu0
        %v1479 = vadd.f32 %v525, %v1478
        %v1480 = vpop.f32.mrf.mxu0
        %v1481 = vadd.f32 %v529, %v1480
        %1482 = vmatprep.mubr.bf16.mxu0 %v373
        %1483 = vmatmul.mubr.bf16.gmra.mxu0 %v372
        %v1484 = vpop.f32.mrf.mxu0
        %v1485 = vadd.f32 %v525, %v1484
        %v1486 = vpop.f32.mrf.mxu0
        %v1487 = vadd.f32 %v529, %v1486
        %v1488 = vpop.f32.mrf.mxu0
        %v1489 = vadd.f32 %v525, %v1488
        %v1490 = vpop.f32.mrf.mxu0
        %v1491 = vadd.f32 %v529, %v1490
        %1492 = vmatprep.mubr.bf16.mxu0 %v377
        %1493 = vmatmul.mubr.bf16.gmra.mxu0 %v376
        %v1494 = vpop.f32.mrf.mxu0
        %v1495 = vadd.f32 %v525, %v1494
        %v1496 = vpop.f32.mrf.mxu0
        %v1497 = vadd.f32 %v529, %v1496
        %v1498 = vpop.f32.mrf.mxu0
        %v1499 = vadd.f32 %v525, %v1498
        %v1500 = vpop.f32.mrf.mxu0
        %v1501 = vadd.f32 %v529, %v1500
        %1502 = vmatprep.mubr.bf16.mxu0 %v381
        %1503 = vmatmul.mubr.bf16.gmra.mxu0 %v380
        %v1504 = vpop.f32.mrf.mxu0
        %v1505 = vadd.f32 %v525, %v1504
        %v1506 = vpop.f32.mrf.mxu0
        %v1507 = vadd.f32 %v529, %v1506
        %v1508 = vpop.f32.mrf.mxu0
        %v1509 = vadd.f32 %v525, %v1508
        %v1510 = vpop.f32.mrf.mxu0
        %v1511 = vadd.f32 %v529, %v1510
        %1512 = vdwg.mxu0
        %1513 = vmatprep.subr.bf16.mxu0 %v1013
        %1514 = vmatpush1.bf16.msra.mxu0 %v1012
        %1515 = vmatprep.subr.bf16.mxu0 %v1009
        %1516 = vmatpush1.bf16.msra.mxu0 %v1008
        %1517 = vmatprep.subr.bf16.mxu0 %v1005
        %1518 = vmatpush1.bf16.msra.mxu0 %v1004
        %1519 = vmatprep.subr.bf16.mxu0 %v1001
        %1520 = vmatpush1.bf16.msra.mxu0 %v1000
        %1521 = vmatprep.subr.bf16.mxu0 %v997
        %1522 = vmatpush1.bf16.msra.mxu0 %v996
        %1523 = vmatprep.subr.bf16.mxu0 %v993
        %1524 = vmatpush1.bf16.msra.mxu0 %v992
        %1525 = vmatprep.subr.bf16.mxu0 %v989
        %1526 = vmatpush1.bf16.msra.mxu0 %v988
        %1527 = vmatprep.subr.bf16.mxu0 %v985
        %1528 = vmatpush1.bf16.msra.mxu0 %v984
        %1529 = vmatprep.subr.bf16.mxu0 %v1045
        %1530 = vmatpush2.bf16.msra.mxu0 %v1044
        %1531 = vmatprep.subr.bf16.mxu0 %v1041
        %1532 = vmatpush2.bf16.msra.mxu0 %v1040
        %1533 = vmatprep.subr.bf16.mxu0 %v1037
        %1534 = vmatpush2.bf16.msra.mxu0 %v1036
        %1535 = vmatprep.subr.bf16.mxu0 %v1033
        %1536 = vmatpush2.bf16.msra.mxu0 %v1032
        %1537 = vmatprep.subr.bf16.mxu0 %v1029
        %1538 = vmatpush2.bf16.msra.mxu0 %v1028
        %1539 = vmatprep.subr.bf16.mxu0 %v1025
        %1540 = vmatpush2.bf16.msra.mxu0 %v1024
        %1541 = vmatprep.subr.bf16.mxu0 %v1021
        %1542 = vmatpush2.bf16.msra.mxu0 %v1020
        %1543 = vmatprep.subr.bf16.mxu0 %v1017
        %1544 = vmatpush2.bf16.msra.mxu0 %v1016
        %1545 = vmatprep.mubr.bf16.mxu0 %v355
        %1546 = vmatmul.mubr.bf16.gmra.mxu0 %v354
        %v1547 = vpop.f32.mrf.mxu0
        %v1548 = vadd.f32 %v1435, %v1547
        %v1549 = vpop.f32.mrf.mxu0
        %v1550 = vadd.f32 %v1437, %v1549
        %v1551 = vpop.f32.mrf.mxu0
        %v1552 = vadd.f32 %v1439, %v1551
        %v1553 = vpop.f32.mrf.mxu0
        %v1554 = vadd.f32 %v1441, %v1553
        %1555 = vmatprep.mubr.bf16.mxu0 %v359
        %1556 = vmatmul.mubr.bf16.gmra.mxu0 %v358
        %v1557 = vpop.f32.mrf.mxu0
        %v1558 = vadd.f32 %v1445, %v1557
        %v1559 = vpop.f32.mrf.mxu0
        %v1560 = vadd.f32 %v1447, %v1559
        %v1561 = vpop.f32.mrf.mxu0
        %v1562 = vadd.f32 %v1449, %v1561
        %v1563 = vpop.f32.mrf.mxu0
        %v1564 = vadd.f32 %v1451, %v1563
        %1565 = vmatprep.mubr.bf16.mxu0 %v363
        %1566 = vmatmul.mubr.bf16.gmra.mxu0 %v362
        %v1567 = vpop.f32.mrf.mxu0
        %v1568 = vadd.f32 %v1455, %v1567
        %v1569 = vpop.f32.mrf.mxu0
        %v1570 = vadd.f32 %v1457, %v1569
        %v1571 = vpop.f32.mrf.mxu0
        %v1572 = vadd.f32 %v1459, %v1571
        %v1573 = vpop.f32.mrf.mxu0
        %v1574 = vadd.f32 %v1461, %v1573
        %1575 = vmatprep.mubr.bf16.mxu0 %v367
        %1576 = vmatmul.mubr.bf16.gmra.mxu0 %v366
        %v1577 = vpop.f32.mrf.mxu0
        %v1578 = vadd.f32 %v1465, %v1577
        %v1579 = vpop.f32.mrf.mxu0
        %v1580 = vadd.f32 %v1467, %v1579
        %v1581 = vpop.f32.mrf.mxu0
        %v1582 = vadd.f32 %v1469, %v1581
        %v1583 = vpop.f32.mrf.mxu0
        %v1584 = vadd.f32 %v1471, %v1583
        %1585 = vmatprep.mubr.bf16.mxu0 %v371
        %1586 = vmatmul.mubr.bf16.gmra.mxu0 %v370
        %v1587 = vpop.f32.mrf.mxu0
        %v1588 = vadd.f32 %v1475, %v1587
        %v1589 = vpop.f32.mrf.mxu0
        %v1590 = vadd.f32 %v1477, %v1589
        %v1591 = vpop.f32.mrf.mxu0
        %v1592 = vadd.f32 %v1479, %v1591
        %v1593 = vpop.f32.mrf.mxu0
        %v1594 = vadd.f32 %v1481, %v1593
        %1595 = vmatprep.mubr.bf16.mxu0 %v375
        %1596 = vmatmul.mubr.bf16.gmra.mxu0 %v374
        %v1597 = vpop.f32.mrf.mxu0
        %v1598 = vadd.f32 %v1485, %v1597
        %v1599 = vpop.f32.mrf.mxu0
        %v1600 = vadd.f32 %v1487, %v1599
        %v1601 = vpop.f32.mrf.mxu0
        %v1602 = vadd.f32 %v1489, %v1601
        %v1603 = vpop.f32.mrf.mxu0
        %v1604 = vadd.f32 %v1491, %v1603
        %1605 = vmatprep.mubr.bf16.mxu0 %v379
        %1606 = vmatmul.mubr.bf16.gmra.mxu0 %v378
        %v1607 = vpop.f32.mrf.mxu0
        %v1608 = vadd.f32 %v1495, %v1607
        %v1609 = vpop.f32.mrf.mxu0
        %v1610 = vadd.f32 %v1497, %v1609
        %v1611 = vpop.f32.mrf.mxu0
        %v1612 = vadd.f32 %v1499, %v1611
        %v1613 = vpop.f32.mrf.mxu0
        %v1614 = vadd.f32 %v1501, %v1613
        %1615 = vmatprep.mubr.bf16.mxu0 %v383
        %1616 = vmatmul.mubr.bf16.gmra.mxu0 %v382
        %v1617 = vpop.f32.mrf.mxu0
        %v1618 = vadd.f32 %v1505, %v1617
        %v1619 = vpop.f32.mrf.mxu0
        %v1620 = vadd.f32 %v1507, %v1619
        %v1621 = vpop.f32.mrf.mxu0
        %v1622 = vadd.f32 %v1509, %v1621
        %v1623 = vpop.f32.mrf.mxu0
        %v1624 = vadd.f32 %v1511, %v1623
        %1625 = vdwg.mxu0
        %v1626 = vmax.f32 %v1322, 0.0
        %v1627 = vmax.f32 %v1324, 0.0
        %v1628 = vmax.f32 %v1548, 0.0
        %v1629 = vmax.f32 %v1550, 0.0
        %v1630 = vmax.f32 %v1326, 0.0
        %v1631 = vmax.f32 %v1328, 0.0
        %v1632 = vmax.f32 %v1552, 0.0
        %v1633 = vmax.f32 %v1554, 0.0
        %v1634 = vmax.f32 %v1332, 0.0
        %v1635 = vmax.f32 %v1334, 0.0
        %v1636 = vmax.f32 %v1558, 0.0
        %v1637 = vmax.f32 %v1560, 0.0
        %v1638 = vmax.f32 %v1336, 0.0
        %v1639 = vmax.f32 %v1338, 0.0
        %v1640 = vmax.f32 %v1562, 0.0
        %v1641 = vmax.f32 %v1564, 0.0
        %v1642 = vmax.f32 %v1342, 0.0
        %v1643 = vmax.f32 %v1344, 0.0
        %v1644 = vmax.f32 %v1568, 0.0
        %v1645 = vmax.f32 %v1570, 0.0
        %v1646 = vmax.f32 %v1346, 0.0
        %v1647 = vmax.f32 %v1348, 0.0
        %v1648 = vmax.f32 %v1572, 0.0
        %v1649 = vmax.f32 %v1574, 0.0
        %v1650 = vmax.f32 %v1352, 0.0
        %v1651 = vmax.f32 %v1354, 0.0
        %v1652 = vmax.f32 %v1578, 0.0
        %v1653 = vmax.f32 %v1580, 0.0
        %v1654 = vmax.f32 %v1356, 0.0
        %v1655 = vmax.f32 %v1358, 0.0
        %v1656 = vmax.f32 %v1582, 0.0
        %v1657 = vmax.f32 %v1584, 0.0
        %v1658 = vmax.f32 %v1362, 0.0
        %v1659 = vmax.f32 %v1364, 0.0
        %v1660 = vmax.f32 %v1588, 0.0
        %v1661 = vmax.f32 %v1590, 0.0
        %v1662 = vmax.f32 %v1366, 0.0
        %v1663 = vmax.f32 %v1368, 0.0
        %v1664 = vmax.f32 %v1592, 0.0
        %v1665 = vmax.f32 %v1594, 0.0
        %v1666 = vmax.f32 %v1372, 0.0
        %v1667 = vmax.f32 %v1374, 0.0
        %v1668 = vmax.f32 %v1598, 0.0
        %v1669 = vmax.f32 %v1600, 0.0
        %v1670 = vmax.f32 %v1376, 0.0
        %v1671 = vmax.f32 %v1378, 0.0
        %v1672 = vmax.f32 %v1602, 0.0
        %v1673 = vmax.f32 %v1604, 0.0
        %v1674 = vmax.f32 %v1382, 0.0
        %v1675 = vmax.f32 %v1384, 0.0
        %v1676 = vmax.f32 %v1608, 0.0
        %v1677 = vmax.f32 %v1610, 0.0
        %v1678 = vmax.f32 %v1386, 0.0
        %v1679 = vmax.f32 %v1388, 0.0
        %v1680 = vmax.f32 %v1612, 0.0
        %v1681 = vmax.f32 %v1614, 0.0
        %v1682 = vmax.f32 %v1392, 0.0
        %v1683 = vmax.f32 %v1394, 0.0
        %v1684 = vmax.f32 %v1618, 0.0
        %v1685 = vmax.f32 %v1620, 0.0
        %v1686 = vmax.f32 %v1396, 0.0
        %v1687 = vmax.f32 %v1398, 0.0
        %v1688 = vmax.f32 %v1622, 0.0
        %v1689 = vmax.f32 %v1624, 0.0
        %v1690 = vpack.c.bf16 %v1630, %v1626
        %v1691 = vpack.c.bf16 %v1631, %v1627
        %v1692 = vpack.c.bf16 %v1632, %v1628
        %v1693 = vpack.c.bf16 %v1633, %v1629
        %v1694 = vpack.c.bf16 %v1638, %v1634
        %v1695 = vpack.c.bf16 %v1639, %v1635
        %v1696 = vpack.c.bf16 %v1640, %v1636
        %v1697 = vpack.c.bf16 %v1641, %v1637
        %v1698 = vpack.c.bf16 %v1646, %v1642
        %v1699 = vpack.c.bf16 %v1647, %v1643
        %v1700 = vpack.c.bf16 %v1648, %v1644
        %v1701 = vpack.c.bf16 %v1649, %v1645
        %v1702 = vpack.c.bf16 %v1654, %v1650
        %v1703 = vpack.c.bf16 %v1655, %v1651
        %v1704 = vpack.c.bf16 %v1656, %v1652
        %v1705 = vpack.c.bf16 %v1657, %v1653
        %v1706 = vpack.c.bf16 %v1662, %v1658
        %v1707 = vpack.c.bf16 %v1663, %v1659
        %v1708 = vpack.c.bf16 %v1664, %v1660
        %v1709 = vpack.c.bf16 %v1665, %v1661
        %v1710 = vpack.c.bf16 %v1670, %v1666
        %v1711 = vpack.c.bf16 %v1671, %v1667
        %v1712 = vpack.c.bf16 %v1672, %v1668
        %v1713 = vpack.c.bf16 %v1673, %v1669
        %v1714 = vpack.c.bf16 %v1678, %v1674
        %v1715 = vpack.c.bf16 %v1679, %v1675
        %v1716 = vpack.c.bf16 %v1680, %v1676
        %v1717 = vpack.c.bf16 %v1681, %v1677
        %v1718 = vpack.c.bf16 %v1686, %v1682
        %v1719 = vpack.c.bf16 %v1687, %v1683
        %v1720 = vpack.c.bf16 %v1688, %v1684
        %v1721 = vpack.c.bf16 %v1689, %v1685
        %v1722 = vld [vmem:[#allocation8] sm:$0xff]
        %v1723 = vld [vmem:[#allocation8 + $0x8] sm:$0xff]
        %v1724 = vld [vmem:[#allocation8 + $0x10] sm:$0xff]
        %v1725 = vld [vmem:[#allocation8 + $0x18] sm:$0xff]
        %v1726 = vld [vmem:[#allocation8 + $0x20] sm:$0xff]
        %v1727 = vld [vmem:[#allocation8 + $0x28] sm:$0xff]
        %v1728 = vld [vmem:[#allocation8 + $0x30] sm:$0xff]
        %v1729 = vld [vmem:[#allocation8 + $0x38] sm:$0xff]
        %v1730 = vld [vmem:[#allocation8 + $0x40] sm:$0xff]
        %v1731 = vld [vmem:[#allocation8 + $0x48] sm:$0xff]
        %v1732 = vld [vmem:[#allocation8 + $0x50] sm:$0xff]
        %v1733 = vld [vmem:[#allocation8 + $0x58] sm:$0xff]
        %v1734 = vld [vmem:[#allocation8 + $0x60] sm:$0xff]
        %v1735 = vld [vmem:[#allocation8 + $0x68] sm:$0xff]
        %v1736 = vld [vmem:[#allocation8 + $0x70] sm:$0xff]
        %v1737 = vld [vmem:[#allocation8 + $0x78] sm:$0xff]
        %v1738 = vld [vmem:[#allocation8 + $0x80] sm:$0xff]
        %v1739 = vld [vmem:[#allocation8 + $0x88] sm:$0xff]
        %v1740 = vld [vmem:[#allocation8 + $0x90] sm:$0xff]
        %v1741 = vld [vmem:[#allocation8 + $0x98] sm:$0xff]
        %v1742 = vld [vmem:[#allocation8 + $0xa0] sm:$0xff]
        %v1743 = vld [vmem:[#allocation8 + $0xa8] sm:$0xff]
        %v1744 = vld [vmem:[#allocation8 + $0xb0] sm:$0xff]
        %v1745 = vld [vmem:[#allocation8 + $0xb8] sm:$0xff]
        %v1746 = vld [vmem:[#allocation8 + $0xc0] sm:$0xff]
        %v1747 = vld [vmem:[#allocation8 + $0xc8] sm:$0xff]
        %v1748 = vld [vmem:[#allocation8 + $0xd0] sm:$0xff]
        %v1749 = vld [vmem:[#allocation8 + $0xd8] sm:$0xff]
        %v1750 = vld [vmem:[#allocation8 + $0xe0] sm:$0xff]
        %v1751 = vld [vmem:[#allocation8 + $0xe8] sm:$0xff]
        %v1752 = vld [vmem:[#allocation8 + $0xf0] sm:$0xff]
        %v1753 = vld [vmem:[#allocation8 + $0xf8] sm:$0xff]
        %v1754 = vld [vmem:[#allocation8 + $0x100] sm:$0xff]
        %v1755 = vld [vmem:[#allocation8 + $0x108] sm:$0xff]
        %v1756 = vld [vmem:[#allocation8 + $0x110] sm:$0xff]
        %v1757 = vld [vmem:[#allocation8 + $0x118] sm:$0xff]
        %v1758 = vld [vmem:[#allocation8 + $0x120] sm:$0xff]
        %v1759 = vld [vmem:[#allocation8 + $0x128] sm:$0xff]
        %v1760 = vld [vmem:[#allocation8 + $0x130] sm:$0xff]
        %v1761 = vld [vmem:[#allocation8 + $0x138] sm:$0xff]
        %v1762 = vld [vmem:[#allocation8 + $0x140] sm:$0xff]
        %v1763 = vld [vmem:[#allocation8 + $0x148] sm:$0xff]
        %v1764 = vld [vmem:[#allocation8 + $0x150] sm:$0xff]
        %v1765 = vld [vmem:[#allocation8 + $0x158] sm:$0xff]
        %v1766 = vld [vmem:[#allocation8 + $0x160] sm:$0xff]
        %v1767 = vld [vmem:[#allocation8 + $0x168] sm:$0xff]
        %v1768 = vld [vmem:[#allocation8 + $0x170] sm:$0xff]
        %v1769 = vld [vmem:[#allocation8 + $0x178] sm:$0xff]
        %v1770 = vld [vmem:[#allocation8 + $0x180] sm:$0xff]
        %v1771 = vld [vmem:[#allocation8 + $0x188] sm:$0xff]
        %v1772 = vld [vmem:[#allocation8 + $0x190] sm:$0xff]
        %v1773 = vld [vmem:[#allocation8 + $0x198] sm:$0xff]
        %v1774 = vld [vmem:[#allocation8 + $0x1a0] sm:$0xff]
        %v1775 = vld [vmem:[#allocation8 + $0x1a8] sm:$0xff]
        %v1776 = vld [vmem:[#allocation8 + $0x1b0] sm:$0xff]
        %v1777 = vld [vmem:[#allocation8 + $0x1b8] sm:$0xff]
        %v1778 = vld [vmem:[#allocation8 + $0x1c0] sm:$0xff]
        %v1779 = vld [vmem:[#allocation8 + $0x1c8] sm:$0xff]
        %v1780 = vld [vmem:[#allocation8 + $0x1d0] sm:$0xff]
        %v1781 = vld [vmem:[#allocation8 + $0x1d8] sm:$0xff]
        %v1782 = vld [vmem:[#allocation8 + $0x1e0] sm:$0xff]
        %v1783 = vld [vmem:[#allocation8 + $0x1e8] sm:$0xff]
        %v1784 = vld [vmem:[#allocation8 + $0x1f0] sm:$0xff]
        %v1785 = vld [vmem:[#allocation8 + $0x1f8] sm:$0xff]
        %v1786 = vld [vmem:[#allocation8 + $0x200] sm:$0xff]
        %v1787 = vld [vmem:[#allocation8 + $0x208] sm:$0xff]
        %v1788 = vld [vmem:[#allocation8 + $0x210] sm:$0xff]
        %v1789 = vld [vmem:[#allocation8 + $0x218] sm:$0xff]
        %v1790 = vld [vmem:[#allocation8 + $0x220] sm:$0xff]
        %v1791 = vld [vmem:[#allocation8 + $0x228] sm:$0xff]
        %v1792 = vld [vmem:[#allocation8 + $0x230] sm:$0xff]
        %v1793 = vld [vmem:[#allocation8 + $0x238] sm:$0xff]
        %v1794 = vld [vmem:[#allocation8 + $0x240] sm:$0xff]
        %v1795 = vld [vmem:[#allocation8 + $0x248] sm:$0xff]
        %v1796 = vld [vmem:[#allocation8 + $0x250] sm:$0xff]
        %v1797 = vld [vmem:[#allocation8 + $0x258] sm:$0xff]
        %v1798 = vld [vmem:[#allocation8 + $0x260] sm:$0xff]
        %v1799 = vld [vmem:[#allocation8 + $0x268] sm:$0xff]
        %v1800 = vld [vmem:[#allocation8 + $0x270] sm:$0xff]
        %v1801 = vld [vmem:[#allocation8 + $0x278] sm:$0xff]
        %v1802 = vld [vmem:[#allocation8 + $0x280] sm:$0xff]
        %v1803 = vld [vmem:[#allocation8 + $0x288] sm:$0xff]
        %v1804 = vld [vmem:[#allocation8 + $0x290] sm:$0xff]
        %v1805 = vld [vmem:[#allocation8 + $0x298] sm:$0xff]
        %v1806 = vld [vmem:[#allocation8 + $0x2a0] sm:$0xff]
        %v1807 = vld [vmem:[#allocation8 + $0x2a8] sm:$0xff]
        %v1808 = vld [vmem:[#allocation8 + $0x2b0] sm:$0xff]
        %v1809 = vld [vmem:[#allocation8 + $0x2b8] sm:$0xff]
        %v1810 = vld [vmem:[#allocation8 + $0x2c0] sm:$0xff]
        %v1811 = vld [vmem:[#allocation8 + $0x2c8] sm:$0xff]
        %v1812 = vld [vmem:[#allocation8 + $0x2d0] sm:$0xff]
        %v1813 = vld [vmem:[#allocation8 + $0x2d8] sm:$0xff]
        %v1814 = vld [vmem:[#allocation8 + $0x2e0] sm:$0xff]
        %v1815 = vld [vmem:[#allocation8 + $0x2e8] sm:$0xff]
        %v1816 = vld [vmem:[#allocation8 + $0x2f0] sm:$0xff]
        %v1817 = vld [vmem:[#allocation8 + $0x2f8] sm:$0xff]
        %v1818 = vld [vmem:[#allocation8 + $0x300] sm:$0xff]
        %v1819 = vld [vmem:[#allocation8 + $0x308] sm:$0xff]
        %v1820 = vld [vmem:[#allocation8 + $0x310] sm:$0xff]
        %v1821 = vld [vmem:[#allocation8 + $0x318] sm:$0xff]
        %v1822 = vld [vmem:[#allocation8 + $0x320] sm:$0xff]
        %v1823 = vld [vmem:[#allocation8 + $0x328] sm:$0xff]
        %v1824 = vld [vmem:[#allocation8 + $0x330] sm:$0xff]
        %v1825 = vld [vmem:[#allocation8 + $0x338] sm:$0xff]
        %v1826 = vld [vmem:[#allocation8 + $0x340] sm:$0xff]
        %v1827 = vld [vmem:[#allocation8 + $0x348] sm:$0xff]
        %v1828 = vld [vmem:[#allocation8 + $0x350] sm:$0xff]
        %v1829 = vld [vmem:[#allocation8 + $0x358] sm:$0xff]
        %v1830 = vld [vmem:[#allocation8 + $0x360] sm:$0xff]
        %v1831 = vld [vmem:[#allocation8 + $0x368] sm:$0xff]
        %v1832 = vld [vmem:[#allocation8 + $0x370] sm:$0xff]
        %v1833 = vld [vmem:[#allocation8 + $0x378] sm:$0xff]
        %v1834 = vld [vmem:[#allocation8 + $0x380] sm:$0xff]
        %v1835 = vld [vmem:[#allocation8 + $0x388] sm:$0xff]
        %v1836 = vld [vmem:[#allocation8 + $0x390] sm:$0xff]
        %v1837 = vld [vmem:[#allocation8 + $0x398] sm:$0xff]
        %v1838 = vld [vmem:[#allocation8 + $0x3a0] sm:$0xff]
        %v1839 = vld [vmem:[#allocation8 + $0x3a8] sm:$0xff]
        %v1840 = vld [vmem:[#allocation8 + $0x3b0] sm:$0xff]
        %v1841 = vld [vmem:[#allocation8 + $0x3b8] sm:$0xff]
        %v1842 = vld [vmem:[#allocation8 + $0x3c0] sm:$0xff]
        %v1843 = vld [vmem:[#allocation8 + $0x3c8] sm:$0xff]
        %v1844 = vld [vmem:[#allocation8 + $0x3d0] sm:$0xff]
        %v1845 = vld [vmem:[#allocation8 + $0x3d8] sm:$0xff]
        %v1846 = vld [vmem:[#allocation8 + $0x3e0] sm:$0xff]
        %v1847 = vld [vmem:[#allocation8 + $0x3e8] sm:$0xff]
        %v1848 = vld [vmem:[#allocation8 + $0x3f0] sm:$0xff]
        %v1849 = vld [vmem:[#allocation8 + $0x3f8] sm:$0xff]
        %v1850 = vld [vmem:[%s4] sm:$0xf]
        %v1852 = vlaneseq
        %v1853 = vshrl.u32 %v1852, 7
        %v1854 = vsub.s32 0, %v1853
        %v1855 = vrot.slane %v1850, %v1854
        %v1856 = vlaneseq
        %v1857 = vshrl.u32 %v1856, 7
        %v1858 = vsub.s32 1, %v1857
        %v1859 = vrot.slane %v1850, %v1858
        %v1860 = vlaneseq
        %v1861 = vshrl.u32 %v1860, 7
        %v1862 = vsub.s32 2, %v1861
        %v1863 = vrot.slane %v1850, %v1862
        %v1864 = vlaneseq
        %v1865 = vshrl.u32 %v1864, 7
        %v1866 = vsub.s32 3, %v1865
        %v1867 = vrot.slane %v1850, %v1866
        %v2000 = vunpack.c.l.b16 %v1722
        %v2001 = vunpack.c.h.b16 %v1722
        %v2002 = vunpack.c.l.b16 %v1723
        %v2003 = vunpack.c.h.b16 %v1723
        %v2004 = vunpack.c.l.b16 %v1724
        %v2005 = vunpack.c.h.b16 %v1724
        %v2006 = vunpack.c.l.b16 %v1725
        %v2007 = vunpack.c.h.b16 %v1725
        %v2008 = vunpack.c.l.b16 %v1726
        %v2009 = vunpack.c.h.b16 %v1726
        %v2010 = vunpack.c.l.b16 %v1727
        %v2011 = vunpack.c.h.b16 %v1727
        %v2012 = vunpack.c.l.b16 %v1728
        %v2013 = vunpack.c.h.b16 %v1728
        %v2014 = vunpack.c.l.b16 %v1729
        %v2015 = vunpack.c.h.b16 %v1729
        %v2016 = vunpack.c.l.b16 %v1730
        %v2017 = vunpack.c.h.b16 %v1730
        %v2018 = vunpack.c.l.b16 %v1731
        %v2019 = vunpack.c.h.b16 %v1731
        %v2020 = vunpack.c.l.b16 %v1732
        %v2021 = vunpack.c.h.b16 %v1732
        %v2022 = vunpack.c.l.b16 %v1733
        %v2023 = vunpack.c.h.b16 %v1733
        %v2024 = vunpack.c.l.b16 %v1734
        %v2025 = vunpack.c.h.b16 %v1734
        %v2026 = vunpack.c.l.b16 %v1735
        %v2027 = vunpack.c.h.b16 %v1735
        %v2028 = vunpack.c.l.b16 %v1736
        %v2029 = vunpack.c.h.b16 %v1736
        %v2030 = vunpack.c.l.b16 %v1737
        %v2031 = vunpack.c.h.b16 %v1737
        %v2032 = vunpack.c.l.b16 %v1738
        %v2033 = vunpack.c.h.b16 %v1738
        %v2034 = vunpack.c.l.b16 %v1739
        %v2035 = vunpack.c.h.b16 %v1739
        %v2036 = vunpack.c.l.b16 %v1740
        %v2037 = vunpack.c.h.b16 %v1740
        %v2038 = vunpack.c.l.b16 %v1741
        %v2039 = vunpack.c.h.b16 %v1741
        %v2040 = vunpack.c.l.b16 %v1742
        %v2041 = vunpack.c.h.b16 %v1742
        %v2042 = vunpack.c.l.b16 %v1743
        %v2043 = vunpack.c.h.b16 %v1743
        %v2044 = vunpack.c.l.b16 %v1744
        %v2045 = vunpack.c.h.b16 %v1744
        %v2046 = vunpack.c.l.b16 %v1745
        %v2047 = vunpack.c.h.b16 %v1745
        %v2048 = vunpack.c.l.b16 %v1746
        %v2049 = vunpack.c.h.b16 %v1746
        %v2050 = vunpack.c.l.b16 %v1747
        %v2051 = vunpack.c.h.b16 %v1747
        %v2052 = vunpack.c.l.b16 %v1748
        %v2053 = vunpack.c.h.b16 %v1748
        %v2054 = vunpack.c.l.b16 %v1749
        %v2055 = vunpack.c.h.b16 %v1749
        %v2056 = vunpack.c.l.b16 %v1750
        %v2057 = vunpack.c.h.b16 %v1750
        %v2058 = vunpack.c.l.b16 %v1751
        %v2059 = vunpack.c.h.b16 %v1751
        %v2060 = vunpack.c.l.b16 %v1752
        %v2061 = vunpack.c.h.b16 %v1752
        %v2062 = vunpack.c.l.b16 %v1753
        %v2063 = vunpack.c.h.b16 %v1753
        %v2064 = vunpack.c.l.b16 %v1754
        %v2065 = vunpack.c.h.b16 %v1754
        %v2066 = vunpack.c.l.b16 %v1755
        %v2067 = vunpack.c.h.b16 %v1755
        %v2068 = vunpack.c.l.b16 %v1756
        %v2069 = vunpack.c.h.b16 %v1756
        %v2070 = vunpack.c.l.b16 %v1757
        %v2071 = vunpack.c.h.b16 %v1757
        %v2072 = vunpack.c.l.b16 %v1758
        %v2073 = vunpack.c.h.b16 %v1758
        %v2074 = vunpack.c.l.b16 %v1759
        %v2075 = vunpack.c.h.b16 %v1759
        %v2076 = vunpack.c.l.b16 %v1760
        %v2077 = vunpack.c.h.b16 %v1760
        %v2078 = vunpack.c.l.b16 %v1761
        %v2079 = vunpack.c.h.b16 %v1761
        %v2080 = vunpack.c.l.b16 %v1762
        %v2081 = vunpack.c.h.b16 %v1762
        %v2082 = vunpack.c.l.b16 %v1763
        %v2083 = vunpack.c.h.b16 %v1763
        %v2084 = vunpack.c.l.b16 %v1764
        %v2085 = vunpack.c.h.b16 %v1764
        %v2086 = vunpack.c.l.b16 %v1765
        %v2087 = vunpack.c.h.b16 %v1765
        %v2088 = vunpack.c.l.b16 %v1766
        %v2089 = vunpack.c.h.b16 %v1766
        %v2090 = vunpack.c.l.b16 %v1767
        %v2091 = vunpack.c.h.b16 %v1767
        %v2092 = vunpack.c.l.b16 %v1768
        %v2093 = vunpack.c.h.b16 %v1768
        %v2094 = vunpack.c.l.b16 %v1769
        %v2095 = vunpack.c.h.b16 %v1769
        %v2096 = vunpack.c.l.b16 %v1770
        %v2097 = vunpack.c.h.b16 %v1770
        %v2098 = vunpack.c.l.b16 %v1771
        %v2099 = vunpack.c.h.b16 %v1771
        %v2100 = vunpack.c.l.b16 %v1772
        %v2101 = vunpack.c.h.b16 %v1772
        %v2102 = vunpack.c.l.b16 %v1773
        %v2103 = vunpack.c.h.b16 %v1773
        %v2104 = vunpack.c.l.b16 %v1774
        %v2105 = vunpack.c.h.b16 %v1774
        %v2106 = vunpack.c.l.b16 %v1775
        %v2107 = vunpack.c.h.b16 %v1775
        %v2108 = vunpack.c.l.b16 %v1776
        %v2109 = vunpack.c.h.b16 %v1776
        %v2110 = vunpack.c.l.b16 %v1777
        %v2111 = vunpack.c.h.b16 %v1777
        %v2112 = vunpack.c.l.b16 %v1778
        %v2113 = vunpack.c.h.b16 %v1778
        %v2114 = vunpack.c.l.b16 %v1779
        %v2115 = vunpack.c.h.b16 %v1779
        %v2116 = vunpack.c.l.b16 %v1780
        %v2117 = vunpack.c.h.b16 %v1780
        %v2118 = vunpack.c.l.b16 %v1781
        %v2119 = vunpack.c.h.b16 %v1781
        %v2120 = vunpack.c.l.b16 %v1782
        %v2121 = vunpack.c.h.b16 %v1782
        %v2122 = vunpack.c.l.b16 %v1783
        %v2123 = vunpack.c.h.b16 %v1783
        %v2124 = vunpack.c.l.b16 %v1784
        %v2125 = vunpack.c.h.b16 %v1784
        %v2126 = vunpack.c.l.b16 %v1785
        %v2127 = vunpack.c.h.b16 %v1785
        %v2128 = vunpack.c.l.b16 %v1786
        %v2129 = vunpack.c.h.b16 %v1786
        %v2130 = vunpack.c.l.b16 %v1787
        %v2131 = vunpack.c.h.b16 %v1787
        %v2132 = vunpack.c.l.b16 %v1788
        %v2133 = vunpack.c.h.b16 %v1788
        %v2134 = vunpack.c.l.b16 %v1789
        %v2135 = vunpack.c.h.b16 %v1789
        %v2136 = vunpack.c.l.b16 %v1790
        %v2137 = vunpack.c.h.b16 %v1790
        %v2138 = vunpack.c.l.b16 %v1791
        %v2139 = vunpack.c.h.b16 %v1791
        %v2140 = vunpack.c.l.b16 %v1792
        %v2141 = vunpack.c.h.b16 %v1792
        %v2142 = vunpack.c.l.b16 %v1793
        %v2143 = vunpack.c.h.b16 %v1793
        %v2144 = vunpack.c.l.b16 %v1794
        %v2145 = vunpack.c.h.b16 %v1794
        %v2146 = vunpack.c.l.b16 %v1795
        %v2147 = vunpack.c.h.b16 %v1795
        %v2148 = vunpack.c.l.b16 %v1796
        %v2149 = vunpack.c.h.b16 %v1796
        %v2150 = vunpack.c.l.b16 %v1797
        %v2151 = vunpack.c.h.b16 %v1797
        %v2152 = vunpack.c.l.b16 %v1798
        %v2153 = vunpack.c.h.b16 %v1798
        %v2154 = vunpack.c.l.b16 %v1799
        %v2155 = vunpack.c.h.b16 %v1799
        %v2156 = vunpack.c.l.b16 %v1800
        %v2157 = vunpack.c.h.b16 %v1800
        %v2158 = vunpack.c.l.b16 %v1801
        %v2159 = vunpack.c.h.b16 %v1801
        %v2160 = vunpack.c.l.b16 %v1802
        %v2161 = vunpack.c.h.b16 %v1802
        %v2162 = vunpack.c.l.b16 %v1803
        %v2163 = vunpack.c.h.b16 %v1803
        %v2164 = vunpack.c.l.b16 %v1804
        %v2165 = vunpack.c.h.b16 %v1804
        %v2166 = vunpack.c.l.b16 %v1805
        %v2167 = vunpack.c.h.b16 %v1805
        %v2168 = vunpack.c.l.b16 %v1806
        %v2169 = vunpack.c.h.b16 %v1806
        %v2170 = vunpack.c.l.b16 %v1807
        %v2171 = vunpack.c.h.b16 %v1807
        %v2172 = vunpack.c.l.b16 %v1808
        %v2173 = vunpack.c.h.b16 %v1808
        %v2174 = vunpack.c.l.b16 %v1809
        %v2175 = vunpack.c.h.b16 %v1809
        %v2176 = vunpack.c.l.b16 %v1810
        %v2177 = vunpack.c.h.b16 %v1810
        %v2178 = vunpack.c.l.b16 %v1811
        %v2179 = vunpack.c.h.b16 %v1811
        %v2180 = vunpack.c.l.b16 %v1812
        %v2181 = vunpack.c.h.b16 %v1812
        %v2182 = vunpack.c.l.b16 %v1813
        %v2183 = vunpack.c.h.b16 %v1813
        %v2184 = vunpack.c.l.b16 %v1814
        %v2185 = vunpack.c.h.b16 %v1814
        %v2186 = vunpack.c.l.b16 %v1815
        %v2187 = vunpack.c.h.b16 %v1815
        %v2188 = vunpack.c.l.b16 %v1816
        %v2189 = vunpack.c.h.b16 %v1816
        %v2190 = vunpack.c.l.b16 %v1817
        %v2191 = vunpack.c.h.b16 %v1817
        %v2192 = vunpack.c.l.b16 %v1818
        %v2193 = vunpack.c.h.b16 %v1818
        %v2194 = vunpack.c.l.b16 %v1819
        %v2195 = vunpack.c.h.b16 %v1819
        %v2196 = vunpack.c.l.b16 %v1820
        %v2197 = vunpack.c.h.b16 %v1820
        %v2198 = vunpack.c.l.b16 %v1821
        %v2199 = vunpack.c.h.b16 %v1821
        %v2200 = vunpack.c.l.b16 %v1822
        %v2201 = vunpack.c.h.b16 %v1822
        %v2202 = vunpack.c.l.b16 %v1823
        %v2203 = vunpack.c.h.b16 %v1823
        %v2204 = vunpack.c.l.b16 %v1824
        %v2205 = vunpack.c.h.b16 %v1824
        %v2206 = vunpack.c.l.b16 %v1825
        %v2207 = vunpack.c.h.b16 %v1825
        %v2208 = vunpack.c.l.b16 %v1826
        %v2209 = vunpack.c.h.b16 %v1826
        %v2210 = vunpack.c.l.b16 %v1827
        %v2211 = vunpack.c.h.b16 %v1827
        %v2212 = vunpack.c.l.b16 %v1828
        %v2213 = vunpack.c.h.b16 %v1828
        %v2214 = vunpack.c.l.b16 %v1829
        %v2215 = vunpack.c.h.b16 %v1829
        %v2216 = vunpack.c.l.b16 %v1830
        %v2217 = vunpack.c.h.b16 %v1830
        %v2218 = vunpack.c.l.b16 %v1831
        %v2219 = vunpack.c.h.b16 %v1831
        %v2220 = vunpack.c.l.b16 %v1832
        %v2221 = vunpack.c.h.b16 %v1832
        %v2222 = vunpack.c.l.b16 %v1833
        %v2223 = vunpack.c.h.b16 %v1833
        %v2224 = vunpack.c.l.b16 %v1834
        %v2225 = vunpack.c.h.b16 %v1834
        %v2226 = vunpack.c.l.b16 %v1835
        %v2227 = vunpack.c.h.b16 %v1835
        %v2228 = vunpack.c.l.b16 %v1836
        %v2229 = vunpack.c.h.b16 %v1836
        %v2230 = vunpack.c.l.b16 %v1837
        %v2231 = vunpack.c.h.b16 %v1837
        %v2232 = vunpack.c.l.b16 %v1838
        %v2233 = vunpack.c.h.b16 %v1838
        %v2234 = vunpack.c.l.b16 %v1839
        %v2235 = vunpack.c.h.b16 %v1839
        %v2236 = vunpack.c.l.b16 %v1840
        %v2237 = vunpack.c.h.b16 %v1840
        %v2238 = vunpack.c.l.b16 %v1841
        %v2239 = vunpack.c.h.b16 %v1841
        %v2240 = vunpack.c.l.b16 %v1842
        %v2241 = vunpack.c.h.b16 %v1842
        %v2242 = vunpack.c.l.b16 %v1843
        %v2243 = vunpack.c.h.b16 %v1843
        %v2244 = vunpack.c.l.b16 %v1844
        %v2245 = vunpack.c.h.b16 %v1844
        %v2246 = vunpack.c.l.b16 %v1845
        %v2247 = vunpack.c.h.b16 %v1845
        %v2248 = vunpack.c.l.b16 %v1846
        %v2249 = vunpack.c.h.b16 %v1846
        %v2250 = vunpack.c.l.b16 %v1847
        %v2251 = vunpack.c.h.b16 %v1847
        %v2252 = vunpack.c.l.b16 %v1848
        %v2253 = vunpack.c.h.b16 %v1848
        %v2254 = vunpack.c.l.b16 %v1849
        %v2255 = vunpack.c.h.b16 %v1849
        %v2256 = vpack.c.b16 %v2004, %v2000
        %v2257 = vpack.c.b16 %v2005, %v2001
        %v2258 = vpack.c.b16 %v2006, %v2002
        %v2259 = vpack.c.b16 %v2007, %v2003
        %v2260 = vpack.c.b16 %v2012, %v2008
        %v2261 = vpack.c.b16 %v2013, %v2009
        %v2262 = vpack.c.b16 %v2014, %v2010
        %v2263 = vpack.c.b16 %v2015, %v2011
        %v2264 = vpack.c.b16 %v2020, %v2016
        %v2265 = vpack.c.b16 %v2021, %v2017
        %v2266 = vpack.c.b16 %v2022, %v2018
        %v2267 = vpack.c.b16 %v2023, %v2019
        %v2268 = vpack.c.b16 %v2028, %v2024
        %v2269 = vpack.c.b16 %v2029, %v2025
        %v2270 = vpack.c.b16 %v2030, %v2026
        %v2271 = vpack.c.b16 %v2031, %v2027
        %v2272 = vpack.c.b16 %v2036, %v2032
        %v2273 = vpack.c.b16 %v2037, %v2033
        %v2274 = vpack.c.b16 %v2038, %v2034
        %v2275 = vpack.c.b16 %v2039, %v2035
        %v2276 = vpack.c.b16 %v2044, %v2040
        %v2277 = vpack.c.b16 %v2045, %v2041
        %v2278 = vpack.c.b16 %v2046, %v2042
        %v2279 = vpack.c.b16 %v2047, %v2043
        %v2280 = vpack.c.b16 %v2052, %v2048
        %v2281 = vpack.c.b16 %v2053, %v2049
        %v2282 = vpack.c.b16 %v2054, %v2050
        %v2283 = vpack.c.b16 %v2055, %v2051
        %v2284 = vpack.c.b16 %v2060, %v2056
        %v2285 = vpack.c.b16 %v2061, %v2057
        %v2286 = vpack.c.b16 %v2062, %v2058
        %v2287 = vpack.c.b16 %v2063, %v2059
        %v2288 = vpack.c.b16 %v2068, %v2064
        %v2289 = vpack.c.b16 %v2069, %v2065
        %v2290 = vpack.c.b16 %v2070, %v2066
        %v2291 = vpack.c.b16 %v2071, %v2067
        %v2292 = vpack.c.b16 %v2076, %v2072
        %v2293 = vpack.c.b16 %v2077, %v2073
        %v2294 = vpack.c.b16 %v2078, %v2074
        %v2295 = vpack.c.b16 %v2079, %v2075
        %v2296 = vpack.c.b16 %v2084, %v2080
        %v2297 = vpack.c.b16 %v2085, %v2081
        %v2298 = vpack.c.b16 %v2086, %v2082
        %v2299 = vpack.c.b16 %v2087, %v2083
        %v2300 = vpack.c.b16 %v2092, %v2088
        %v2301 = vpack.c.b16 %v2093, %v2089
        %v2302 = vpack.c.b16 %v2094, %v2090
        %v2303 = vpack.c.b16 %v2095, %v2091
        %v2304 = vpack.c.b16 %v2100, %v2096
        %v2305 = vpack.c.b16 %v2101, %v2097
        %v2306 = vpack.c.b16 %v2102, %v2098
        %v2307 = vpack.c.b16 %v2103, %v2099
        %v2308 = vpack.c.b16 %v2108, %v2104
        %v2309 = vpack.c.b16 %v2109, %v2105
        %v2310 = vpack.c.b16 %v2110, %v2106
        %v2311 = vpack.c.b16 %v2111, %v2107
        %v2312 = vpack.c.b16 %v2116, %v2112
        %v2313 = vpack.c.b16 %v2117, %v2113
        %v2314 = vpack.c.b16 %v2118, %v2114
        %v2315 = vpack.c.b16 %v2119, %v2115
        %v2316 = vpack.c.b16 %v2124, %v2120
        %v2317 = vpack.c.b16 %v2125, %v2121
        %v2318 = vpack.c.b16 %v2126, %v2122
        %v2319 = vpack.c.b16 %v2127, %v2123
        %v2320 = vpack.c.b16 %v2132, %v2128
        %v2321 = vpack.c.b16 %v2133, %v2129
        %v2322 = vpack.c.b16 %v2134, %v2130
        %v2323 = vpack.c.b16 %v2135, %v2131
        %v2324 = vpack.c.b16 %v2140, %v2136
        %v2325 = vpack.c.b16 %v2141, %v2137
        %v2326 = vpack.c.b16 %v2142, %v2138
        %v2327 = vpack.c.b16 %v2143, %v2139
        %v2328 = vpack.c.b16 %v2148, %v2144
        %v2329 = vpack.c.b16 %v2149, %v2145
        %v2330 = vpack.c.b16 %v2150, %v2146
        %v2331 = vpack.c.b16 %v2151, %v2147
        %v2332 = vpack.c.b16 %v2156, %v2152
        %v2333 = vpack.c.b16 %v2157, %v2153
        %v2334 = vpack.c.b16 %v2158, %v2154
        %v2335 = vpack.c.b16 %v2159, %v2155
        %v2336 = vpack.c.b16 %v2164, %v2160
        %v2337 = vpack.c.b16 %v2165, %v2161
        %v2338 = vpack.c.b16 %v2166, %v2162
        %v2339 = vpack.c.b16 %v2167, %v2163
        %v2340 = vpack.c.b16 %v2172, %v2168
        %v2341 = vpack.c.b16 %v2173, %v2169
        %v2342 = vpack.c.b16 %v2174, %v2170
        %v2343 = vpack.c.b16 %v2175, %v2171
        %v2344 = vpack.c.b16 %v2180, %v2176
        %v2345 = vpack.c.b16 %v2181, %v2177
        %v2346 = vpack.c.b16 %v2182, %v2178
        %v2347 = vpack.c.b16 %v2183, %v2179
        %v2348 = vpack.c.b16 %v2188, %v2184
        %v2349 = vpack.c.b16 %v2189, %v2185
        %v2350 = vpack.c.b16 %v2190, %v2186
        %v2351 = vpack.c.b16 %v2191, %v2187
        %v2352 = vpack.c.b16 %v2196, %v2192
        %v2353 = vpack.c.b16 %v2197, %v2193
        %v2354 = vpack.c.b16 %v2198, %v2194
        %v2355 = vpack.c.b16 %v2199, %v2195
        %v2356 = vpack.c.b16 %v2204, %v2200
        %v2357 = vpack.c.b16 %v2205, %v2201
        %v2358 = vpack.c.b16 %v2206, %v2202
        %v2359 = vpack.c.b16 %v2207, %v2203
        %v2360 = vpack.c.b16 %v2212, %v2208
        %v2361 = vpack.c.b16 %v2213, %v2209
        %v2362 = vpack.c.b16 %v2214, %v2210
        %v2363 = vpack.c.b16 %v2215, %v2211
        %v2364 = vpack.c.b16 %v2220, %v2216
        %v2365 = vpack.c.b16 %v2221, %v2217
        %v2366 = vpack.c.b16 %v2222, %v2218
        %v2367 = vpack.c.b16 %v2223, %v2219
        %v2368 = vpack.c.b16 %v2228, %v2224
        %v2369 = vpack.c.b16 %v2229, %v2225
        %v2370 = vpack.c.b16 %v2230, %v2226
        %v2371 = vpack.c.b16 %v2231, %v2227
        %v2372 = vpack.c.b16 %v2236, %v2232
        %v2373 = vpack.c.b16 %v2237, %v2233
        %v2374 = vpack.c.b16 %v2238, %v2234
        %v2375 = vpack.c.b16 %v2239, %v2235
        %v2376 = vpack.c.b16 %v2244, %v2240
        %v2377 = vpack.c.b16 %v2245, %v2241
        %v2378 = vpack.c.b16 %v2246, %v2242
        %v2379 = vpack.c.b16 %v2247, %v2243
        %v2380 = vpack.c.b16 %v2252, %v2248
        %v2381 = vpack.c.b16 %v2253, %v2249
        %v2382 = vpack.c.b16 %v2254, %v2250
        %v2383 = vpack.c.b16 %v2255, %v2251
        %2512 = vmatprep.subr.bf16.mxu0 %v2285
        %2513 = vmatpush1.bf16.msra.mxu0 %v2284
        %2514 = vmatprep.subr.bf16.mxu0 %v2281
        %2515 = vmatpush1.bf16.msra.mxu0 %v2280
        %2516 = vmatprep.subr.bf16.mxu0 %v2277
        %2517 = vmatpush1.bf16.msra.mxu0 %v2276
        %2518 = vmatprep.subr.bf16.mxu0 %v2273
        %2519 = vmatpush1.bf16.msra.mxu0 %v2272
        %2520 = vmatprep.subr.bf16.mxu0 %v2269
        %2521 = vmatpush1.bf16.msra.mxu0 %v2268
        %2522 = vmatprep.subr.bf16.mxu0 %v2265
        %2523 = vmatpush1.bf16.msra.mxu0 %v2264
        %2524 = vmatprep.subr.bf16.mxu0 %v2261
        %2525 = vmatpush1.bf16.msra.mxu0 %v2260
        %2526 = vmatprep.subr.bf16.mxu0 %v2257
        %2527 = vmatpush1.bf16.msra.mxu0 %v2256
        %2528 = vmatprep.subr.bf16.mxu0 %v2317
        %2529 = vmatpush2.bf16.msra.mxu0 %v2316
        %2530 = vmatprep.subr.bf16.mxu0 %v2313
        %2531 = vmatpush2.bf16.msra.mxu0 %v2312
        %2532 = vmatprep.subr.bf16.mxu0 %v2309
        %2533 = vmatpush2.bf16.msra.mxu0 %v2308
        %2534 = vmatprep.subr.bf16.mxu0 %v2305
        %2535 = vmatpush2.bf16.msra.mxu0 %v2304
        %2536 = vmatprep.subr.bf16.mxu0 %v2301
        %2537 = vmatpush2.bf16.msra.mxu0 %v2300
        %2538 = vmatprep.subr.bf16.mxu0 %v2297
        %2539 = vmatpush2.bf16.msra.mxu0 %v2296
        %2540 = vmatprep.subr.bf16.mxu0 %v2293
        %2541 = vmatpush2.bf16.msra.mxu0 %v2292
        %2542 = vmatprep.subr.bf16.mxu0 %v2289
        %2543 = vmatpush2.bf16.msra.mxu0 %v2288
        %2544 = vmatprep.mubr.bf16.mxu0 %v1691
        %2545 = vmatmul.mubr.bf16.gmra.mxu0 %v1690
        %v2546 = vpop.f32.mrf.mxu0
        %v2547 = vadd.f32 %v1855, %v2546
        %v2548 = vpop.f32.mrf.mxu0
        %v2549 = vadd.f32 %v1859, %v2548
        %v2550 = vpop.f32.mrf.mxu0
        %v2551 = vadd.f32 %v1855, %v2550
        %v2552 = vpop.f32.mrf.mxu0
        %v2553 = vadd.f32 %v1859, %v2552
        %2554 = vmatprep.mubr.bf16.mxu0 %v1695
        %2555 = vmatmul.mubr.bf16.gmra.mxu0 %v1694
        %v2556 = vpop.f32.mrf.mxu0
        %v2557 = vadd.f32 %v1855, %v2556
        %v2558 = vpop.f32.mrf.mxu0
        %v2559 = vadd.f32 %v1859, %v2558
        %v2560 = vpop.f32.mrf.mxu0
        %v2561 = vadd.f32 %v1855, %v2560
        %v2562 = vpop.f32.mrf.mxu0
        %v2563 = vadd.f32 %v1859, %v2562
        %2564 = vmatprep.mubr.bf16.mxu0 %v1699
        %2565 = vmatmul.mubr.bf16.gmra.mxu0 %v1698
        %v2566 = vpop.f32.mrf.mxu0
        %v2567 = vadd.f32 %v1855, %v2566
        %v2568 = vpop.f32.mrf.mxu0
        %v2569 = vadd.f32 %v1859, %v2568
        %v2570 = vpop.f32.mrf.mxu0
        %v2571 = vadd.f32 %v1855, %v2570
        %v2572 = vpop.f32.mrf.mxu0
        %v2573 = vadd.f32 %v1859, %v2572
        %2574 = vmatprep.mubr.bf16.mxu0 %v1703
        %2575 = vmatmul.mubr.bf16.gmra.mxu0 %v1702
        %v2576 = vpop.f32.mrf.mxu0
        %v2577 = vadd.f32 %v1855, %v2576
        %v2578 = vpop.f32.mrf.mxu0
        %v2579 = vadd.f32 %v1859, %v2578
        %v2580 = vpop.f32.mrf.mxu0
        %v2581 = vadd.f32 %v1855, %v2580
        %v2582 = vpop.f32.mrf.mxu0
        %v2583 = vadd.f32 %v1859, %v2582
        %2584 = vmatprep.mubr.bf16.mxu0 %v1707
        %2585 = vmatmul.mubr.bf16.gmra.mxu0 %v1706
        %v2586 = vpop.f32.mrf.mxu0
        %v2587 = vadd.f32 %v1855, %v2586
        %v2588 = vpop.f32.mrf.mxu0
        %v2589 = vadd.f32 %v1859, %v2588
        %v2590 = vpop.f32.mrf.mxu0
        %v2591 = vadd.f32 %v1855, %v2590
        %v2592 = vpop.f32.mrf.mxu0
        %v2593 = vadd.f32 %v1859, %v2592
        %2594 = vmatprep.mubr.bf16.mxu0 %v1711
        %2595 = vmatmul.mubr.bf16.gmra.mxu0 %v1710
        %v2596 = vpop.f32.mrf.mxu0
        %v2597 = vadd.f32 %v1855, %v2596
        %v2598 = vpop.f32.mrf.mxu0
        %v2599 = vadd.f32 %v1859, %v2598
        %v2600 = vpop.f32.mrf.mxu0
        %v2601 = vadd.f32 %v1855, %v2600
        %v2602 = vpop.f32.mrf.mxu0
        %v2603 = vadd.f32 %v1859, %v2602
        %2604 = vmatprep.mubr.bf16.mxu0 %v1715
        %2605 = vmatmul.mubr.bf16.gmra.mxu0 %v1714
        %v2606 = vpop.f32.mrf.mxu0
        %v2607 = vadd.f32 %v1855, %v2606
        %v2608 = vpop.f32.mrf.mxu0
        %v2609 = vadd.f32 %v1859, %v2608
        %v2610 = vpop.f32.mrf.mxu0
        %v2611 = vadd.f32 %v1855, %v2610
        %v2612 = vpop.f32.mrf.mxu0
        %v2613 = vadd.f32 %v1859, %v2612
        %2614 = vmatprep.mubr.bf16.mxu0 %v1719
        %2615 = vmatmul.mubr.bf16.gmra.mxu0 %v1718
        %v2616 = vpop.f32.mrf.mxu0
        %v2617 = vadd.f32 %v1855, %v2616
        %v2618 = vpop.f32.mrf.mxu0
        %v2619 = vadd.f32 %v1859, %v2618
        %v2620 = vpop.f32.mrf.mxu0
        %v2621 = vadd.f32 %v1855, %v2620
        %v2622 = vpop.f32.mrf.mxu0
        %v2623 = vadd.f32 %v1859, %v2622
        %2624 = vdwg.mxu0
        %2625 = vmatprep.subr.bf16.mxu0 %v2349
        %2626 = vmatpush1.bf16.msra.mxu0 %v2348
        %2627 = vmatprep.subr.bf16.mxu0 %v2345
        %2628 = vmatpush1.bf16.msra.mxu0 %v2344
        %2629 = vmatprep.subr.bf16.mxu0 %v2341
        %2630 = vmatpush1.bf16.msra.mxu0 %v2340
        %2631 = vmatprep.subr.bf16.mxu0 %v2337
        %2632 = vmatpush1.bf16.msra.mxu0 %v2336
        %2633 = vmatprep.subr.bf16.mxu0 %v2333
        %2634 = vmatpush1.bf16.msra.mxu0 %v2332
        %2635 = vmatprep.subr.bf16.mxu0 %v2329
        %2636 = vmatpush1.bf16.msra.mxu0 %v2328
        %2637 = vmatprep.subr.bf16.mxu0 %v2325
        %2638 = vmatpush1.bf16.msra.mxu0 %v2324
        %2639 = vmatprep.subr.bf16.mxu0 %v2321
        %2640 = vmatpush1.bf16.msra.mxu0 %v2320
        %2641 = vmatprep.subr.bf16.mxu0 %v2381
        %2642 = vmatpush2.bf16.msra.mxu0 %v2380
        %2643 = vmatprep.subr.bf16.mxu0 %v2377
        %2644 = vmatpush2.bf16.msra.mxu0 %v2376
        %2645 = vmatprep.subr.bf16.mxu0 %v2373
        %2646 = vmatpush2.bf16.msra.mxu0 %v2372
        %2647 = vmatprep.subr.bf16.mxu0 %v2369
        %2648 = vmatpush2.bf16.msra.mxu0 %v2368
        %2649 = vmatprep.subr.bf16.mxu0 %v2365
        %2650 = vmatpush2.bf16.msra.mxu0 %v2364
        %2651 = vmatprep.subr.bf16.mxu0 %v2361
        %2652 = vmatpush2.bf16.msra.mxu0 %v2360
        %2653 = vmatprep.subr.bf16.mxu0 %v2357
        %2654 = vmatpush2.bf16.msra.mxu0 %v2356
        %2655 = vmatprep.subr.bf16.mxu0 %v2353
        %2656 = vmatpush2.bf16.msra.mxu0 %v2352
        %2657 = vmatprep.mubr.bf16.mxu0 %v1693
        %2658 = vmatmul.mubr.bf16.gmra.mxu0 %v1692
        %v2659 = vpop.f32.mrf.mxu0
        %v2660 = vadd.f32 %v2547, %v2659
        %v2661 = vpop.f32.mrf.mxu0
        %v2662 = vadd.f32 %v2549, %v2661
        %v2663 = vpop.f32.mrf.mxu0
        %v2664 = vadd.f32 %v2551, %v2663
        %v2665 = vpop.f32.mrf.mxu0
        %v2666 = vadd.f32 %v2553, %v2665
        %2667 = vmatprep.mubr.bf16.mxu0 %v1697
        %2668 = vmatmul.mubr.bf16.gmra.mxu0 %v1696
        %v2669 = vpop.f32.mrf.mxu0
        %v2670 = vadd.f32 %v2557, %v2669
        %v2671 = vpop.f32.mrf.mxu0
        %v2672 = vadd.f32 %v2559, %v2671
        %v2673 = vpop.f32.mrf.mxu0
        %v2674 = vadd.f32 %v2561, %v2673
        %v2675 = vpop.f32.mrf.mxu0
        %v2676 = vadd.f32 %v2563, %v2675
        %2677 = vmatprep.mubr.bf16.mxu0 %v1701
        %2678 = vmatmul.mubr.bf16.gmra.mxu0 %v1700
        %v2679 = vpop.f32.mrf.mxu0
        %v2680 = vadd.f32 %v2567, %v2679
        %v2681 = vpop.f32.mrf.mxu0
        %v2682 = vadd.f32 %v2569, %v2681
        %v2683 = vpop.f32.mrf.mxu0
        %v2684 = vadd.f32 %v2571, %v2683
        %v2685 = vpop.f32.mrf.mxu0
        %v2686 = vadd.f32 %v2573, %v2685
        %2687 = vmatprep.mubr.bf16.mxu0 %v1705
        %2688 = vmatmul.mubr.bf16.gmra.mxu0 %v1704
        %v2689 = vpop.f32.mrf.mxu0
        %v2690 = vadd.f32 %v2577, %v2689
        %v2691 = vpop.f32.mrf.mxu0
        %v2692 = vadd.f32 %v2579, %v2691
        %v2693 = vpop.f32.mrf.mxu0
        %v2694 = vadd.f32 %v2581, %v2693
        %v2695 = vpop.f32.mrf.mxu0
        %v2696 = vadd.f32 %v2583, %v2695
        %2697 = vmatprep.mubr.bf16.mxu0 %v1709
        %2698 = vmatmul.mubr.bf16.gmra.mxu0 %v1708
        %v2699 = vpop.f32.mrf.mxu0
        %v2700 = vadd.f32 %v2587, %v2699
        %v2701 = vpop.f32.mrf.mxu0
        %v2702 = vadd.f32 %v2589, %v2701
        %v2703 = vpop.f32.mrf.mxu0
        %v2704 = vadd.f32 %v2591, %v2703
        %v2705 = vpop.f32.mrf.mxu0
        %v2706 = vadd.f32 %v2593, %v2705
        %2707 = vmatprep.mubr.bf16.mxu0 %v1713
        %2708 = vmatmul.mubr.bf16.gmra.mxu0 %v1712
        %v2709 = vpop.f32.mrf.mxu0
        %v2710 = vadd.f32 %v2597, %v2709
        %v2711 = vpop.f32.mrf.mxu0
        %v2712 = vadd.f32 %v2599, %v2711
        %v2713 = vpop.f32.mrf.mxu0
        %v2714 = vadd.f32 %v2601, %v2713
        %v2715 = vpop.f32.mrf.mxu0
        %v2716 = vadd.f32 %v2603, %v2715
        %2717 = vmatprep.mubr.bf16.mxu0 %v1717
        %2718 = vmatmul.mubr.bf16.gmra.mxu0 %v1716
        %v2719 = vpop.f32.mrf.mxu0
        %v2720 = vadd.f32 %v2607, %v2719
        %v2721 = vpop.f32.mrf.mxu0
        %v2722 = vadd.f32 %v2609, %v2721
        %v2723 = vpop.f32.mrf.mxu0
        %v2724 = vadd.f32 %v2611, %v2723
        %v2725 = vpop.f32.mrf.mxu0
        %v2726 = vadd.f32 %v2613, %v2725
        %2727 = vmatprep.mubr.bf16.mxu0 %v1721
        %2728 = vmatmul.mubr.bf16.gmra.mxu0 %v1720
        %v2729 = vpop.f32.mrf.mxu0
        %v2730 = vadd.f32 %v2617, %v2729
        %v2731 = vpop.f32.mrf.mxu0
        %v2732 = vadd.f32 %v2619, %v2731
        %v2733 = vpop.f32.mrf.mxu0
        %v2734 = vadd.f32 %v2621, %v2733
        %v2735 = vpop.f32.mrf.mxu0
        %v2736 = vadd.f32 %v2623, %v2735
        %2737 = vdwg.mxu0
        %2738 = vmatprep.subr.bf16.mxu0 %v2287
        %2739 = vmatpush1.bf16.msra.mxu0 %v2286
        %2740 = vmatprep.subr.bf16.mxu0 %v2283
        %2741 = vmatpush1.bf16.msra.mxu0 %v2282
        %2742 = vmatprep.subr.bf16.mxu0 %v2279
        %2743 = vmatpush1.bf16.msra.mxu0 %v2278
        %2744 = vmatprep.subr.bf16.mxu0 %v2275
        %2745 = vmatpush1.bf16.msra.mxu0 %v2274
        %2746 = vmatprep.subr.bf16.mxu0 %v2271
        %2747 = vmatpush1.bf16.msra.mxu0 %v2270
        %2748 = vmatprep.subr.bf16.mxu0 %v2267
        %2749 = vmatpush1.bf16.msra.mxu0 %v2266
        %2750 = vmatprep.subr.bf16.mxu0 %v2263
        %2751 = vmatpush1.bf16.msra.mxu0 %v2262
        %2752 = vmatprep.subr.bf16.mxu0 %v2259
        %2753 = vmatpush1.bf16.msra.mxu0 %v2258
        %2754 = vmatprep.subr.bf16.mxu0 %v2319
        %2755 = vmatpush2.bf16.msra.mxu0 %v2318
        %2756 = vmatprep.subr.bf16.mxu0 %v2315
        %2757 = vmatpush2.bf16.msra.mxu0 %v2314
        %2758 = vmatprep.subr.bf16.mxu0 %v2311
        %2759 = vmatpush2.bf16.msra.mxu0 %v2310
        %2760 = vmatprep.subr.bf16.mxu0 %v2307
        %2761 = vmatpush2.bf16.msra.mxu0 %v2306
        %2762 = vmatprep.subr.bf16.mxu0 %v2303
        %2763 = vmatpush2.bf16.msra.mxu0 %v2302
        %2764 = vmatprep.subr.bf16.mxu0 %v2299
        %2765 = vmatpush2.bf16.msra.mxu0 %v2298
        %2766 = vmatprep.subr.bf16.mxu0 %v2295
        %2767 = vmatpush2.bf16.msra.mxu0 %v2294
        %2768 = vmatprep.subr.bf16.mxu0 %v2291
        %2769 = vmatpush2.bf16.msra.mxu0 %v2290
        %2770 = vmatprep.mubr.bf16.mxu0 %v1691
        %2771 = vmatmul.mubr.bf16.gmra.mxu0 %v1690
        %v2772 = vpop.f32.mrf.mxu0
        %v2773 = vadd.f32 %v1863, %v2772
        %v2774 = vpop.f32.mrf.mxu0
        %v2775 = vadd.f32 %v1867, %v2774
        %v2776 = vpop.f32.mrf.mxu0
        %v2777 = vadd.f32 %v1863, %v2776
        %v2778 = vpop.f32.mrf.mxu0
        %v2779 = vadd.f32 %v1867, %v2778
        %2780 = vmatprep.mubr.bf16.mxu0 %v1695
        %2781 = vmatmul.mubr.bf16.gmra.mxu0 %v1694
        %v2782 = vpop.f32.mrf.mxu0
        %v2783 = vadd.f32 %v1863, %v2782
        %v2784 = vpop.f32.mrf.mxu0
        %v2785 = vadd.f32 %v1867, %v2784
        %v2786 = vpop.f32.mrf.mxu0
        %v2787 = vadd.f32 %v1863, %v2786
        %v2788 = vpop.f32.mrf.mxu0
        %v2789 = vadd.f32 %v1867, %v2788
        %2790 = vmatprep.mubr.bf16.mxu0 %v1699
        %2791 = vmatmul.mubr.bf16.gmra.mxu0 %v1698
        %v2792 = vpop.f32.mrf.mxu0
        %v2793 = vadd.f32 %v1863, %v2792
        %v2794 = vpop.f32.mrf.mxu0
        %v2795 = vadd.f32 %v1867, %v2794
        %v2796 = vpop.f32.mrf.mxu0
        %v2797 = vadd.f32 %v1863, %v2796
        %v2798 = vpop.f32.mrf.mxu0
        %v2799 = vadd.f32 %v1867, %v2798
        %2800 = vmatprep.mubr.bf16.mxu0 %v1703
        %2801 = vmatmul.mubr.bf16.gmra.mxu0 %v1702
        %v2802 = vpop.f32.mrf.mxu0
        %v2803 = vadd.f32 %v1863, %v2802
        %v2804 = vpop.f32.mrf.mxu0
        %v2805 = vadd.f32 %v1867, %v2804
        %v2806 = vpop.f32.mrf.mxu0
        %v2807 = vadd.f32 %v1863, %v2806
        %v2808 = vpop.f32.mrf.mxu0
        %v2809 = vadd.f32 %v1867, %v2808
        %2810 = vmatprep.mubr.bf16.mxu0 %v1707
        %2811 = vmatmul.mubr.bf16.gmra.mxu0 %v1706
        %v2812 = vpop.f32.mrf.mxu0
        %v2813 = vadd.f32 %v1863, %v2812
        %v2814 = vpop.f32.mrf.mxu0
        %v2815 = vadd.f32 %v1867, %v2814
        %v2816 = vpop.f32.mrf.mxu0
        %v2817 = vadd.f32 %v1863, %v2816
        %v2818 = vpop.f32.mrf.mxu0
        %v2819 = vadd.f32 %v1867, %v2818
        %2820 = vmatprep.mubr.bf16.mxu0 %v1711
        %2821 = vmatmul.mubr.bf16.gmra.mxu0 %v1710
        %v2822 = vpop.f32.mrf.mxu0
        %v2823 = vadd.f32 %v1863, %v2822
        %v2824 = vpop.f32.mrf.mxu0
        %v2825 = vadd.f32 %v1867, %v2824
        %v2826 = vpop.f32.mrf.mxu0
        %v2827 = vadd.f32 %v1863, %v2826
        %v2828 = vpop.f32.mrf.mxu0
        %v2829 = vadd.f32 %v1867, %v2828
        %2830 = vmatprep.mubr.bf16.mxu0 %v1715
        %2831 = vmatmul.mubr.bf16.gmra.mxu0 %v1714
        %v2832 = vpop.f32.mrf.mxu0
        %v2833 = vadd.f32 %v1863, %v2832
        %v2834 = vpop.f32.mrf.mxu0
        %v2835 = vadd.f32 %v1867, %v2834
        %v2836 = vpop.f32.mrf.mxu0
        %v2837 = vadd.f32 %v1863, %v2836
        %v2838 = vpop.f32.mrf.mxu0
        %v2839 = vadd.f32 %v1867, %v2838
        %2840 = vmatprep.mubr.bf16.mxu0 %v1719
        %2841 = vmatmul.mubr.bf16.gmra.mxu0 %v1718
        %v2842 = vpop.f32.mrf.mxu0
        %v2843 = vadd.f32 %v1863, %v2842
        %v2844 = vpop.f32.mrf.mxu0
        %v2845 = vadd.f32 %v1867, %v2844
        %v2846 = vpop.f32.mrf.mxu0
        %v2847 = vadd.f32 %v1863, %v2846
        %v2848 = vpop.f32.mrf.mxu0
        %v2849 = vadd.f32 %v1867, %v2848
        %2850 = vdwg.mxu0
        %2851 = vmatprep.subr.bf16.mxu0 %v2351
        %2852 = vmatpush1.bf16.msra.mxu0 %v2350
        %2853 = vmatprep.subr.bf16.mxu0 %v2347
        %2854 = vmatpush1.bf16.msra.mxu0 %v2346
        %2855 = vmatprep.subr.bf16.mxu0 %v2343
        %2856 = vmatpush1.bf16.msra.mxu0 %v2342
        %2857 = vmatprep.subr.bf16.mxu0 %v2339
        %2858 = vmatpush1.bf16.msra.mxu0 %v2338
        %2859 = vmatprep.subr.bf16.mxu0 %v2335
        %2860 = vmatpush1.bf16.msra.mxu0 %v2334
        %2861 = vmatprep.subr.bf16.mxu0 %v2331
        %2862 = vmatpush1.bf16.msra.mxu0 %v2330
        %2863 = vmatprep.subr.bf16.mxu0 %v2327
        %2864 = vmatpush1.bf16.msra.mxu0 %v2326
        %2865 = vmatprep.subr.bf16.mxu0 %v2323
        %2866 = vmatpush1.bf16.msra.mxu0 %v2322
        %2867 = vmatprep.subr.bf16.mxu0 %v2383
        %2868 = vmatpush2.bf16.msra.mxu0 %v2382
        %2869 = vmatprep.subr.bf16.mxu0 %v2379
        %2870 = vmatpush2.bf16.msra.mxu0 %v2378
        %2871 = vmatprep.subr.bf16.mxu0 %v2375
        %2872 = vmatpush2.bf16.msra.mxu0 %v2374
        %2873 = vmatprep.subr.bf16.mxu0 %v2371
        %2874 = vmatpush2.bf16.msra.mxu0 %v2370
        %2875 = vmatprep.subr.bf16.mxu0 %v2367
        %2876 = vmatpush2.bf16.msra.mxu0 %v2366
        %2877 = vmatprep.subr.bf16.mxu0 %v2363
        %2878 = vmatpush2.bf16.msra.mxu0 %v2362
        %2879 = vmatprep.subr.bf16.mxu0 %v2359
        %2880 = vmatpush2.bf16.msra.mxu0 %v2358
        %2881 = vmatprep.subr.bf16.mxu0 %v2355
        %2882 = vmatpush2.bf16.msra.mxu0 %v2354
        %2883 = vmatprep.mubr.bf16.mxu0 %v1693
        %2884 = vmatmul.mubr.bf16.gmra.mxu0 %v1692
        %v2885 = vpop.f32.mrf.mxu0
        %v2886 = vadd.f32 %v2773, %v2885
        %v2887 = vpop.f32.mrf.mxu0
        %v2888 = vadd.f32 %v2775, %v2887
        %v2889 = vpop.f32.mrf.mxu0
        %v2890 = vadd.f32 %v2777, %v2889
        %v2891 = vpop.f32.mrf.mxu0
        %v2892 = vadd.f32 %v2779, %v2891
        %2893 = vmatprep.mubr.bf16.mxu0 %v1697
        %2894 = vmatmul.mubr.bf16.gmra.mxu0 %v1696
        %v2895 = vpop.f32.mrf.mxu0
        %v2896 = vadd.f32 %v2783, %v2895
        %v2897 = vpop.f32.mrf.mxu0
        %v2898 = vadd.f32 %v2785, %v2897
        %v2899 = vpop.f32.mrf.mxu0
        %v2900 = vadd.f32 %v2787, %v2899
        %v2901 = vpop.f32.mrf.mxu0
        %v2902 = vadd.f32 %v2789, %v2901
        %2903 = vmatprep.mubr.bf16.mxu0 %v1701
        %2904 = vmatmul.mubr.bf16.gmra.mxu0 %v1700
        %v2905 = vpop.f32.mrf.mxu0
        %v2906 = vadd.f32 %v2793, %v2905
        %v2907 = vpop.f32.mrf.mxu0
        %v2908 = vadd.f32 %v2795, %v2907
        %v2909 = vpop.f32.mrf.mxu0
        %v2910 = vadd.f32 %v2797, %v2909
        %v2911 = vpop.f32.mrf.mxu0
        %v2912 = vadd.f32 %v2799, %v2911
        %2913 = vmatprep.mubr.bf16.mxu0 %v1705
        %2914 = vmatmul.mubr.bf16.gmra.mxu0 %v1704
        %v2915 = vpop.f32.mrf.mxu0
        %v2916 = vadd.f32 %v2803, %v2915
        %v2917 = vpop.f32.mrf.mxu0
        %v2918 = vadd.f32 %v2805, %v2917
        %v2919 = vpop.f32.mrf.mxu0
        %v2920 = vadd.f32 %v2807, %v2919
        %v2921 = vpop.f32.mrf.mxu0
        %v2922 = vadd.f32 %v2809, %v2921
        %2923 = vmatprep.mubr.bf16.mxu0 %v1709
        %2924 = vmatmul.mubr.bf16.gmra.mxu0 %v1708
        %v2925 = vpop.f32.mrf.mxu0
        %v2926 = vadd.f32 %v2813, %v2925
        %v2927 = vpop.f32.mrf.mxu0
        %v2928 = vadd.f32 %v2815, %v2927
        %v2929 = vpop.f32.mrf.mxu0
        %v2930 = vadd.f32 %v2817, %v2929
        %v2931 = vpop.f32.mrf.mxu0
        %v2932 = vadd.f32 %v2819, %v2931
        %2933 = vmatprep.mubr.bf16.mxu0 %v1713
        %2934 = vmatmul.mubr.bf16.gmra.mxu0 %v1712
        %v2935 = vpop.f32.mrf.mxu0
        %v2936 = vadd.f32 %v2823, %v2935
        %v2937 = vpop.f32.mrf.mxu0
        %v2938 = vadd.f32 %v2825, %v2937
        %v2939 = vpop.f32.mrf.mxu0
        %v2940 = vadd.f32 %v2827, %v2939
        %v2941 = vpop.f32.mrf.mxu0
        %v2942 = vadd.f32 %v2829, %v2941
        %2943 = vmatprep.mubr.bf16.mxu0 %v1717
        %2944 = vmatmul.mubr.bf16.gmra.mxu0 %v1716
        %v2945 = vpop.f32.mrf.mxu0
        %v2946 = vadd.f32 %v2833, %v2945
        %v2947 = vpop.f32.mrf.mxu0
        %v2948 = vadd.f32 %v2835, %v2947
        %v2949 = vpop.f32.mrf.mxu0
        %v2950 = vadd.f32 %v2837, %v2949
        %v2951 = vpop.f32.mrf.mxu0
        %v2952 = vadd.f32 %v2839, %v2951
        %2953 = vmatprep.mubr.bf16.mxu0 %v1721
        %2954 = vmatmul.mubr.bf16.gmra.mxu0 %v1720
        %v2955 = vpop.f32.mrf.mxu0
        %v2956 = vadd.f32 %v2843, %v2955
        %v2957 = vpop.f32.mrf.mxu0
        %v2958 = vadd.f32 %v2845, %v2957
        %v2959 = vpop.f32.mrf.mxu0
        %v2960 = vadd.f32 %v2847, %v2959
        %v2961 = vpop.f32.mrf.mxu0
        %v2962 = vadd.f32 %v2849, %v2961
        %2963 = vdwg.mxu0
        %v2964 = vpack.c.bf16 %v2664, %v2660
        %v2965 = vpack.c.bf16 %v2666, %v2662
        %v2966 = vpack.c.bf16 %v2890, %v2886
        %v2967 = vpack.c.bf16 %v2892, %v2888
        %v2968 = vpack.c.bf16 %v2674, %v2670
        %v2969 = vpack.c.bf16 %v2676, %v2672
        %v2970 = vpack.c.bf16 %v2900, %v2896
        %v2971 = vpack.c.bf16 %v2902, %v2898
        %v2972 = vpack.c.bf16 %v2684, %v2680
        %v2973 = vpack.c.bf16 %v2686, %v2682
        %v2974 = vpack.c.bf16 %v2910, %v2906
        %v2975 = vpack.c.bf16 %v2912, %v2908
        %v2976 = vpack.c.bf16 %v2694, %v2690
        %v2977 = vpack.c.bf16 %v2696, %v2692
        %v2978 = vpack.c.bf16 %v2920, %v2916
        %v2979 = vpack.c.bf16 %v2922, %v2918
        %v2980 = vpack.c.bf16 %v2704, %v2700
        %v2981 = vpack.c.bf16 %v2706, %v2702
        %v2982 = vpack.c.bf16 %v2930, %v2926
        %v2983 = vpack.c.bf16 %v2932, %v2928
        %v2984 = vpack.c.bf16 %v2714, %v2710
        %v2985 = vpack.c.bf16 %v2716, %v2712
        %v2986 = vpack.c.bf16 %v2940, %v2936
        %v2987 = vpack.c.bf16 %v2942, %v2938
        %v2988 = vpack.c.bf16 %v2724, %v2720
        %v2989 = vpack.c.bf16 %v2726, %v2722
        %v2990 = vpack.c.bf16 %v2950, %v2946
        %v2991 = vpack.c.bf16 %v2952, %v2948
        %v2992 = vpack.c.bf16 %v2734, %v2730
        %v2993 = vpack.c.bf16 %v2736, %v2732
        %v2994 = vpack.c.bf16 %v2960, %v2956
        %v2995 = vpack.c.bf16 %v2962, %v2958
        %v3028 = vunpack.c.l.b16 %v2964
        %v3029 = vunpack.c.l.b16 %v2965
        %v3030 = vunpack.c.l.b16 %v2966
        %v3031 = vunpack.c.l.b16 %v2967
        %v3032 = vunpack.c.h.b16 %v2964
        %v3033 = vunpack.c.h.b16 %v2965
        %v3034 = vunpack.c.h.b16 %v2966
        %v3035 = vunpack.c.h.b16 %v2967
        %v3036 = vunpack.c.l.b16 %v2968
        %v3037 = vunpack.c.l.b16 %v2969
        %v3038 = vunpack.c.l.b16 %v2970
        %v3039 = vunpack.c.l.b16 %v2971
        %v3040 = vunpack.c.h.b16 %v2968
        %v3041 = vunpack.c.h.b16 %v2969
        %v3042 = vunpack.c.h.b16 %v2970
        %v3043 = vunpack.c.h.b16 %v2971
        %v3044 = vunpack.c.l.b16 %v2972
        %v3045 = vunpack.c.l.b16 %v2973
        %v3046 = vunpack.c.l.b16 %v2974
        %v3047 = vunpack.c.l.b16 %v2975
        %v3048 = vunpack.c.h.b16 %v2972
        %v3049 = vunpack.c.h.b16 %v2973
        %v3050 = vunpack.c.h.b16 %v2974
        %v3051 = vunpack.c.h.b16 %v2975
        %v3052 = vunpack.c.l.b16 %v2976
        %v3053 = vunpack.c.l.b16 %v2977
        %v3054 = vunpack.c.l.b16 %v2978
        %v3055 = vunpack.c.l.b16 %v2979
        %v3056 = vunpack.c.h.b16 %v2976
        %v3057 = vunpack.c.h.b16 %v2977
        %v3058 = vunpack.c.h.b16 %v2978
        %v3059 = vunpack.c.h.b16 %v2979
        %v3060 = vunpack.c.l.b16 %v2980
        %v3061 = vunpack.c.l.b16 %v2981
        %v3062 = vunpack.c.l.b16 %v2982
        %v3063 = vunpack.c.l.b16 %v2983
        %v3064 = vunpack.c.h.b16 %v2980
        %v3065 = vunpack.c.h.b16 %v2981
        %v3066 = vunpack.c.h.b16 %v2982
        %v3067 = vunpack.c.h.b16 %v2983
        %v3068 = vunpack.c.l.b16 %v2984
        %v3069 = vunpack.c.l.b16 %v2985
        %v3070 = vunpack.c.l.b16 %v2986
        %v3071 = vunpack.c.l.b16 %v2987
        %v3072 = vunpack.c.h.b16 %v2984
        %v3073 = vunpack.c.h.b16 %v2985
        %v3074 = vunpack.c.h.b16 %v2986
        %v3075 = vunpack.c.h.b16 %v2987
        %v3076 = vunpack.c.l.b16 %v2988
        %v3077 = vunpack.c.l.b16 %v2989
        %v3078 = vunpack.c.l.b16 %v2990
        %v3079 = vunpack.c.l.b16 %v2991
        %v3080 = vunpack.c.h.b16 %v2988
        %v3081 = vunpack.c.h.b16 %v2989
        %v3082 = vunpack.c.h.b16 %v2990
        %v3083 = vunpack.c.h.b16 %v2991
        %v3084 = vunpack.c.l.b16 %v2992
        %v3085 = vunpack.c.l.b16 %v2993
        %v3086 = vunpack.c.l.b16 %v2994
        %v3087 = vunpack.c.l.b16 %v2995
        %v3088 = vunpack.c.h.b16 %v2992
        %v3089 = vunpack.c.h.b16 %v2993
        %v3090 = vunpack.c.h.b16 %v2994
        %v3091 = vunpack.c.h.b16 %v2995
        %v3092 = vpack.c.b16 %v3029, %v3028
        %v3093 = vpack.c.b16 %v3031, %v3030
        %v3094 = vpack.c.b16 %v3033, %v3032
        %v3095 = vpack.c.b16 %v3035, %v3034
        %v3096 = vpack.c.b16 %v3037, %v3036
        %v3097 = vpack.c.b16 %v3039, %v3038
        %v3098 = vpack.c.b16 %v3041, %v3040
        %v3099 = vpack.c.b16 %v3043, %v3042
        %v3100 = vpack.c.b16 %v3045, %v3044
        %v3101 = vpack.c.b16 %v3047, %v3046
        %v3102 = vpack.c.b16 %v3049, %v3048
        %v3103 = vpack.c.b16 %v3051, %v3050
        %v3104 = vpack.c.b16 %v3053, %v3052
        %v3105 = vpack.c.b16 %v3055, %v3054
        %v3106 = vpack.c.b16 %v3057, %v3056
        %v3107 = vpack.c.b16 %v3059, %v3058
        %v3108 = vpack.c.b16 %v3061, %v3060
        %v3109 = vpack.c.b16 %v3063, %v3062
        %v3110 = vpack.c.b16 %v3065, %v3064
        %v3111 = vpack.c.b16 %v3067, %v3066
        %v3112 = vpack.c.b16 %v3069, %v3068
        %v3113 = vpack.c.b16 %v3071, %v3070
        %v3114 = vpack.c.b16 %v3073, %v3072
        %v3115 = vpack.c.b16 %v3075, %v3074
        %v3116 = vpack.c.b16 %v3077, %v3076
        %v3117 = vpack.c.b16 %v3079, %v3078
        %v3118 = vpack.c.b16 %v3081, %v3080
        %v3119 = vpack.c.b16 %v3083, %v3082
        %v3120 = vpack.c.b16 %v3085, %v3084
        %v3121 = vpack.c.b16 %v3087, %v3086
        %v3122 = vpack.c.b16 %v3089, %v3088
        %v3123 = vpack.c.b16 %v3091, %v3090
        %3156 = vst [vmem:[%s285] sm:$0xff] %v3092
        %3157 = vst [vmem:[%s285 + $0x8] sm:$0xff] %v3093
        %3158 = vst [vmem:[%s285 + $0x10] sm:$0xff] %v3094
        %3159 = vst [vmem:[%s285 + $0x18] sm:$0xff] %v3095
        %3160 = vst [vmem:[%s285 + $0x20] sm:$0xff] %v3096
        %3161 = vst [vmem:[%s285 + $0x28] sm:$0xff] %v3097
        %3162 = vst [vmem:[%s285 + $0x30] sm:$0xff] %v3098
        %3163 = vst [vmem:[%s285 + $0x38] sm:$0xff] %v3099
        %3164 = vst [vmem:[%s285 + $0x40] sm:$0xff] %v3100
        %3165 = vst [vmem:[%s285 + $0x48] sm:$0xff] %v3101
        %3166 = vst [vmem:[%s285 + $0x50] sm:$0xff] %v3102
        %3167 = vst [vmem:[%s285 + $0x58] sm:$0xff] %v3103
        %3168 = vst [vmem:[%s285 + $0x60] sm:$0xff] %v3104
        %3169 = vst [vmem:[%s285 + $0x68] sm:$0xff] %v3105
        %3170 = vst [vmem:[%s285 + $0x70] sm:$0xff] %v3106
        %3171 = vst [vmem:[%s285 + $0x78] sm:$0xff] %v3107
        %3172 = vst [vmem:[%s285 + $0x80] sm:$0xff] %v3108
        %3173 = vst [vmem:[%s285 + $0x88] sm:$0xff] %v3109
        %3174 = vst [vmem:[%s285 + $0x90] sm:$0xff] %v3110
        %3175 = vst [vmem:[%s285 + $0x98] sm:$0xff] %v3111
        %3176 = vst [vmem:[%s285 + $0xa0] sm:$0xff] %v3112
        %3177 = vst [vmem:[%s285 + $0xa8] sm:$0xff] %v3113
        %3178 = vst [vmem:[%s285 + $0xb0] sm:$0xff] %v3114
        %3179 = vst [vmem:[%s285 + $0xb8] sm:$0xff] %v3115
        %3180 = vst [vmem:[%s285 + $0xc0] sm:$0xff] %v3116
        %3181 = vst [vmem:[%s285 + $0xc8] sm:$0xff] %v3117
        %3182 = vst [vmem:[%s285 + $0xd0] sm:$0xff] %v3118
        %3183 = vst [vmem:[%s285 + $0xd8] sm:$0xff] %v3119
        %3184 = vst [vmem:[%s285 + $0xe0] sm:$0xff] %v3120
        %3185 = vst [vmem:[%s285 + $0xe8] sm:$0xff] %v3121
        %3186 = vst [vmem:[%s285 + $0xf0] sm:$0xff] %v3122
        %3187 = vst [vmem:[%s285 + $0xf8] sm:$0xff] %v3123
        %s3188 = sand.u32 %s142, 1
        %s3189 = scalar_lea.sflag [#allocation4], %s3188
        %s3190 = sand.u32 %s142, 1
        %s3191 = smul.addr %s3190, 256
        %s3192 = scalar_lea.vmem [#allocation10], %s3191
        // Predicated region
        $region57: #{tpu_custom_call.1} parent=39 // pred_check
          %p3193 = pneg %p152
        $region58: #{tpu_custom_call.1} parent=39 // pred_check_branch
          %3195 = sbr.rel (%p3193) target = $region60
        $region59: #{tpu_custom_call.1} parent=39 // pred_region
          %s3196 = smul.u32 16, %s24
          %s3198 = ssub.s32 4096, 4096
          %3199 = vsyncadd %s3189, %s3198
          %s3200 = smul.addr %s3196, 4
          %s3201 = smul.addr %s3200, 64
          %s3202 = scalar_lea.hbm %s5, %s3201
          %s3203 = sshll.u32 %s3192, 4
          %s3204 = int_to_ptr.vmem [resolvable:$true] %s3203
          %3209 = dma.vmem_to_hbm [thread:$0]  %s3204, 4096, %s3202, %s3189, 256, 256, 16
        $region60: #{tpu_custom_call.1} parent=39 // pred_fallthru
          _
      $region40: #{tpu_custom_call.1} parent=5 // pred_fallthru
        _
      %p3210 = scmp.le.s32.totalorder 2, %s19
      // Predicated region
      $region61: #{tpu_custom_call.1} parent=5 // pred_check
        %p3211 = pneg %p3210
      $region62: #{tpu_custom_call.1} parent=5 // pred_check_branch
        %3213 = sbr.rel (%p3211) target = $region64
      $region63: #{tpu_custom_call.1} parent=5 // pred_region
        %s3214 = ssub.s32 %s19, 2
        // Predicated region
        $region65: #{tpu_custom_call.1} parent=63 // pred_check
          %p3215 = pneg %p158
        $region66: #{tpu_custom_call.1} parent=63 // pred_check_branch
          %3217 = sbr.rel (%p3215) target = $region68
        $region67: #{tpu_custom_call.1} parent=63 // pred_region
          %s3218 = sand.u32 %s143, 1
          %s3219 = scalar_lea.sflag [#allocation4], %s3218
          %s3220 = sand.u32 %s143, 1
          %s3221 = smul.addr %s3220, 256
          %s3222 = scalar_lea.vmem [#allocation10], %s3221
          %3223 = dma.done %s3219, 4096
        $region68: #{tpu_custom_call.1} parent=63 // pred_fallthru
          _
      $region64: #{tpu_custom_call.1} parent=5 // pred_fallthru
        _
    $region6: #{tpu_custom_call.1} parent=1 // loop_footer
      %s23 = sadd.s32 1, %s19
    $region7: #{tpu_custom_call.1} parent=1 // loop_footer_branch
      %18 = sbr.rel target = $region3
    $region8: #{tpu_custom_call.1} parent=1 // loop_exit
      _
    %3224 = vsyncpa [#allocation3], 1
    %s3225 = scalar_lea.sflag [#allocation3], 1
    %3226 = vsyncpa %s3225, 1
    %3227 = vsyncpa [#allocation6], 1
    %3228 = vsyncpa [#allocation9], 1
    %3229 = vsyncpa [#allocation4], 1
    %s3230 = scalar_lea.sflag [#allocation4], 1
    %3231 = vsyncpa %s3230, 1

</llo_original>
